<compile_context>
chip_gen: v5e
topology: v5e:2x2
jax: 0.10.0
libtpu: 0.0.40
codegen_flags: <defaults>
</compile_context>

<pallas_src>
import jax
import jax.numpy as jnp
from jax.experimental import pallas as pl
from jax.experimental.pallas import tpu as pltpu


def _round_up(x, m):
    return (x + m - 1) // m * m


# ----------------------------- Pallas kernels ------------------------------ #

def _conv_relu_pool_kernel(p00_ref, p01_ref, p10_ref, p11_ref, w_ref, b_ref, o_ref):
    """Fused conv(as matmul) + bias + ReLU + 2x2 max-pool.

    Each p??_ref holds the im2col patch rows for one of the 4 positions of the
    2x2 pooling window; the pool is the elementwise max of the 4 matmul results
    (bias add and ReLU commute with the max, so they are applied once at the end).
    """
    w = w_ref[...]
    acc = jnp.dot(p00_ref[...], w, preferred_element_type=jnp.float32)
    acc = jnp.maximum(acc, jnp.dot(p01_ref[...], w, preferred_element_type=jnp.float32))
    acc = jnp.maximum(acc, jnp.dot(p10_ref[...], w, preferred_element_type=jnp.float32))
    acc = jnp.maximum(acc, jnp.dot(p11_ref[...], w, preferred_element_type=jnp.float32))
    acc = jnp.maximum(acc + b_ref[...], 0.0)          # bias + ReLU
    o_ref[...] = acc.astype(o_ref.dtype)


def conv_relu_pool(p4, w, b, *, bm_max=1024):
    """p4: 4 x (M, K) patch matrices; w: (K, Cout); b: (Cout,) -> (M, Cout)."""
    p00, p01, p10, p11 = p4
    M, K = p00.shape
    Cout = w.shape[1]
    BM = bm_max if M >= bm_max else _round_up(M, 8)
    Mp = _round_up(M, BM)
    if Mp != M:  # pad rows so the grid tiles evenly; padded rows are sliced off
        pad = ((0, Mp - M), (0, 0))
        p00, p01, p10, p11 = (jnp.pad(t, pad) for t in (p00, p01, p10, p11))
    row_spec = pl.BlockSpec((BM, K), lambda i: (i, 0))
    out = pl.pallas_call(
        _conv_relu_pool_kernel,
        out_shape=jax.ShapeDtypeStruct((Mp, Cout), jnp.float32),
        grid=(Mp // BM,),
        in_specs=[row_spec, row_spec, row_spec, row_spec,
                  pl.BlockSpec((K, Cout), lambda i: (0, 0)),
                  pl.BlockSpec((1, Cout), lambda i: (0, 0))],
        out_specs=pl.BlockSpec((BM, Cout), lambda i: (i, 0)),
        compiler_params=pltpu.CompilerParams(dimension_semantics=("parallel",)),
    )(p00, p01, p10, p11, w, b.reshape(1, Cout))
    return out[:M]


def _mlp_kernel(x_ref, w1_ref, b1_ref, w2_ref, b2_ref, w3_ref, b3_ref, o_ref):
    """fc1+ReLU -> fc2+ReLU -> fc3, all intermediates stay on-chip."""
    h = jnp.dot(x_ref[...], w1_ref[...], preferred_element_type=jnp.float32) + b1_ref[...]
    h = jnp.maximum(h, 0.0)
    h = jnp.dot(h, w2_ref[...], preferred_element_type=jnp.float32) + b2_ref[...]
    h = jnp.maximum(h, 0.0)
    o = jnp.dot(h, w3_ref[...], preferred_element_type=jnp.float32) + b3_ref[...]
    o_ref[...] = o.astype(o_ref.dtype)


def mlp3(x, w1, b1, w2, b2, w3, b3, *, bm_max=1024):
    """Three fused Linear layers.  x:(M,K); w_i:(in,out); b_i:(out,)."""
    M, K = x.shape
    H1, H2, NO = w1.shape[1], w2.shape[1], w3.shape[1]
    BM = bm_max if M >= bm_max else _round_up(M, 8)
    Mp = _round_up(M, BM)
    if Mp != M:
        x = jnp.pad(x, ((0, Mp - M), (0, 0)))
    out = pl.pallas_call(
        _mlp_kernel,
        out_shape=jax.ShapeDtypeStruct((Mp, NO), jnp.float32),
        grid=(Mp // BM,),
        in_specs=[pl.BlockSpec((BM, K), lambda i: (i, 0)),
                  pl.BlockSpec((K, H1), lambda i: (0, 0)),
                  pl.BlockSpec((1, H1), lambda i: (0, 0)),
                  pl.BlockSpec((H1, H2), lambda i: (0, 0)),
                  pl.BlockSpec((1, H2), lambda i: (0, 0)),
                  pl.BlockSpec((H2, NO), lambda i: (0, 0)),
                  pl.BlockSpec((1, NO), lambda i: (0, 0))],
        out_specs=pl.BlockSpec((BM, NO), lambda i: (i, 0)),
        compiler_params=pltpu.CompilerParams(dimension_semantics=("parallel",)),
    )(x, w1, b1.reshape(1, H1), w2, b2.reshape(1, H2), w3, b3.reshape(1, NO))
    return out[:M]


# ------------------------------- JAX glue ---------------------------------- #

def im2col_pool4(x_nhwc, kh, kw):
    """im2col patches, pre-split by 2x2 pool-window offset.

    Returns 4 matrices of shape (N*PH*PW, kh*kw*C) -- one per pool offset --
    plus (N, PH, PW).  Patches are stacked on the LAST axis (no activation
    transpose); K ordering is (kh, kw, cin), so weights are permuted to match.
    """
    N, H, W, C = x_nhwc.shape
    OH, OW = H - kh + 1, W - kw + 1
    PH, PW = OH // 2, OW // 2
    K = kh * kw * C
    cols = [x_nhwc[:, i:i + OH, j:j + OW, :] for i in range(kh) for j in range(kw)]
    p = jnp.concatenate(cols, axis=-1)                       # (N, OH, OW, K)
    p4 = tuple(p[:, di:2 * PH:2, dj:2 * PW:2, :].reshape(N * PH * PW, K)
               for di in range(2) for dj in range(2))
    return p4, (N, PH, PW)


def init_params(key):
    """Deterministic PyTorch-default-style (kaiming-uniform-ish) init."""
    def uniform(k, shape, fan_in):
        bound = 1.0 / jnp.sqrt(float(fan_in))
        return jax.random.uniform(k, shape, jnp.float32, -bound, bound)

    ks = jax.random.split(key, 10)
    return {
        # conv weights in PyTorch layout (Cout, Cin, KH, KW)
        "conv1_w": uniform(ks[0], (6, 1, 5, 5), 1 * 5 * 5),
        "conv1_b": uniform(ks[1], (6,), 1 * 5 * 5),
        "conv2_w": uniform(ks[2], (16, 6, 5, 5), 6 * 5 * 5),
        "conv2_b": uniform(ks[3], (16,), 6 * 5 * 5),
        # fc weights stored as (in, out)  (== torch weight.T), torch row order
        "fc1_w": uniform(ks[4], (16 * 5 * 5, 120), 16 * 5 * 5),
        "fc1_b": uniform(ks[5], (120,), 16 * 5 * 5),
        "fc2_w": uniform(ks[6], (120, 84), 120),
        "fc2_b": uniform(ks[7], (84,), 120),
        "fc3_w": uniform(ks[8], (84, 10), 84),
        "fc3_b": uniform(ks[9], (10,), 84),
    }


def net_forward(x_nchw, params):
    N = x_nchw.shape[0]
    x = jnp.transpose(x_nchw, (0, 2, 3, 1)).astype(jnp.float32)   # NCHW -> NHWC

    # --- stage 1: conv1 (1->6, 5x5) + bias + ReLU + 2x2 max-pool, one kernel ---
    w1 = jnp.transpose(params["conv1_w"], (2, 3, 1, 0)).reshape(25, 6)   # (kh,kw,cin)xCout
    p4, (_, ph, pw) = im2col_pool4(x, 5, 5)
    y = conv_relu_pool(p4, w1, params["conv1_b"]).reshape(N, ph, pw, 6)   # (N,14,14,6)

    # --- stage 2: conv2 (6->16, 5x5) + bias + ReLU + 2x2 max-pool, one kernel ---
    w2 = jnp.transpose(params["conv2_w"], (2, 3, 1, 0)).reshape(150, 16)
    p4, (_, ph, pw) = im2col_pool4(y, 5, 5)
    y = conv_relu_pool(p4, w2, params["conv2_b"]).reshape(N, ph, pw, 16)  # (N,5,5,16)

    # --- stage 3: fc1+ReLU -> fc2+ReLU -> fc3, one fused kernel ---
    # torch flattens NCHW; instead of transposing the activation we permute
    # fc1's (tiny) weight rows from (c,h,w) order to (h,w,c) order.
    flat = y.reshape(N, 5 * 5 * 16)                                       # NHWC flatten
    fc1_w = params["fc1_w"].reshape(16, 5, 5, 120).transpose(1, 2, 0, 3).reshape(400, 120)
    return mlp3(flat, fc1_w, params["fc1_b"],
                params["fc2_w"], params["fc2_b"],
                params["fc3_w"], params["fc3_b"])


# Pure-JAX reference (for correctness check only).
def net_forward_ref(x_nchw, params):
    def conv(x, w, b):
        y = jax.lax.conv_general_dilated(
            x, w, window_strides=(1, 1), padding="VALID",
            dimension_numbers=("NCHW", "OIHW", "NCHW"))
        return y + b.reshape(1, -1, 1, 1)

    def pool(x):
        return jax.lax.reduce_window(x, -jnp.inf, jax.lax.max,
                                     (1, 1, 2, 2), (1, 1, 2, 2), "VALID")

    y = pool(jnp.maximum(conv(x_nchw, params["conv1_w"], params["conv1_b"]), 0.0))
    y = pool(jnp.maximum(conv(y, params["conv2_w"], params["conv2_b"]), 0.0))
    flat = y.reshape(y.shape[0], -1)
    h = jnp.maximum(flat @ params["fc1_w"] + params["fc1_b"], 0.0)
    h = jnp.maximum(h @ params["fc2_w"] + params["fc2_b"], 0.0)
    return h @ params["fc3_w"] + params["fc3_b"]


if __name__ == "__main__":
    key = jax.random.PRNGKey(0)
    k_in, k_p = jax.random.split(key)
    # Input consistent with the module: 16*5*5 after two conv+pool => 32x32 input.
    x = jax.random.normal(k_in, (2, 1, 32, 32), dtype=jnp.float32)
    params = init_params(k_p)

    out = jax.block_until_ready(jax.jit(net_forward)(x, params))
    assert out.shape == (2, 10) and out.dtype == jnp.float32

    ref = jax.block_until_ready(jax.jit(net_forward_ref)(x, params))
    assert jnp.allclose(out, ref, rtol=1e-3, atol=1e-3), "mismatch vs pure-JAX reference"
    print("KERNEL_OK")
</pallas_src>

<mosaic_0001>
module attributes {stable_mosaic.version = 11 : i64} {
  func.func @_conv_relu_pool_kernel(%arg0: i32, %arg1: memref<392x25xf32, #tpu.memory_space<vmem>>, %arg2: memref<392x25xf32, #tpu.memory_space<vmem>>, %arg3: memref<392x25xf32, #tpu.memory_space<vmem>>, %arg4: memref<392x25xf32, #tpu.memory_space<vmem>>, %arg5: memref<25x6xf32, #tpu.memory_space<vmem>>, %arg6: memref<1x6xf32, #tpu.memory_space<vmem>>, %arg7: memref<392x6xf32, #tpu.memory_space<vmem>>) attributes {dimension_semantics = [#tpu.dimension_semantics<parallel>], iteration_bounds = array<i64: 1>, scalar_prefetch = 0 : i64, scratch_operands = 0 : i64, tpu.core_type = #tpu.core_type<tc>, window_params = [{transform_indices = @transform_0, window_bounds = array<i64: 392, 25>}, {transform_indices = @transform_1, window_bounds = array<i64: 392, 25>}, {transform_indices = @transform_2, window_bounds = array<i64: 392, 25>}, {transform_indices = @transform_3, window_bounds = array<i64: 392, 25>}, {pipeline_mode = #tpu.pipeline_mode<synchronous>, transform_indices = @transform_4, window_bounds = array<i64: 25, 6>}, {pipeline_mode = #tpu.pipeline_mode<synchronous>, transform_indices = @transform_5, window_bounds = array<i64: 1, 6>}, {transform_indices = @transform_6, window_bounds = array<i64: 392, 6>}]} {
    %c0 = arith.constant 0 : index
    %c0_0 = arith.constant 0 : index
    %0 = vector.load %arg5[%c0, %c0_0] : memref<25x6xf32, #tpu.memory_space<vmem>>, vector<25x6xf32>
    %c0_1 = arith.constant 0 : index
    %c0_2 = arith.constant 0 : index
    %1 = vector.load %arg1[%c0_1, %c0_2] : memref<392x25xf32, #tpu.memory_space<vmem>>, vector<392x25xf32>
    %cst = arith.constant dense<0.000000e+00> : vector<392x6xf32>
    %2 = tpu.matmul %1, %0, %cst {dimension_numbers = #tpu.dot_dimension_numbers<[1], [0], [0], [1], [0, 0, 1, 1], [], []>} : vector<392x25xf32>, vector<25x6xf32>, vector<392x6xf32> -> vector<392x6xf32>
    %c0_3 = arith.constant 0 : index
    %c0_4 = arith.constant 0 : index
    %3 = vector.load %arg2[%c0_3, %c0_4] : memref<392x25xf32, #tpu.memory_space<vmem>>, vector<392x25xf32>
    %cst_5 = arith.constant dense<0.000000e+00> : vector<392x6xf32>
    %4 = tpu.matmul %3, %0, %cst_5 {dimension_numbers = #tpu.dot_dimension_numbers<[1], [0], [0], [1], [0, 0, 1, 1], [], []>} : vector<392x25xf32>, vector<25x6xf32>, vector<392x6xf32> -> vector<392x6xf32>
    %5 = arith.maximumf %2, %4 : vector<392x6xf32>
    %c0_6 = arith.constant 0 : index
    %c0_7 = arith.constant 0 : index
    %6 = vector.load %arg3[%c0_6, %c0_7] : memref<392x25xf32, #tpu.memory_space<vmem>>, vector<392x25xf32>
    %cst_8 = arith.constant dense<0.000000e+00> : vector<392x6xf32>
    %7 = tpu.matmul %6, %0, %cst_8 {dimension_numbers = #tpu.dot_dimension_numbers<[1], [0], [0], [1], [0, 0, 1, 1], [], []>} : vector<392x25xf32>, vector<25x6xf32>, vector<392x6xf32> -> vector<392x6xf32>
    %8 = arith.maximumf %5, %7 : vector<392x6xf32>
    %c0_9 = arith.constant 0 : index
    %c0_10 = arith.constant 0 : index
    %9 = vector.load %arg4[%c0_9, %c0_10] : memref<392x25xf32, #tpu.memory_space<vmem>>, vector<392x25xf32>
    %cst_11 = arith.constant dense<0.000000e+00> : vector<392x6xf32>
    %10 = tpu.matmul %9, %0, %cst_11 {dimension_numbers = #tpu.dot_dimension_numbers<[1], [0], [0], [1], [0, 0, 1, 1], [], []>} : vector<392x25xf32>, vector<25x6xf32>, vector<392x6xf32> -> vector<392x6xf32>
    %11 = arith.maximumf %8, %10 : vector<392x6xf32>
    %c0_12 = arith.constant 0 : index
    %c0_13 = arith.constant 0 : index
    %12 = vector.load %arg6[%c0_12, %c0_13] : memref<1x6xf32, #tpu.memory_space<vmem>>, vector<1x6xf32>
    %13 = vector.broadcast %12 : vector<1x6xf32> to vector<392x6xf32>
    %14 = arith.addf %11, %13 : vector<392x6xf32>
    %cst_14 = arith.constant 0.000000e+00 : f32
    %15 = vector.broadcast %cst_14 : f32 to vector<392x6xf32>
    %16 = arith.maximumf %14, %15 : vector<392x6xf32>
    %c0_15 = arith.constant 0 : index
    %c0_16 = arith.constant 0 : index
    %17 = vector.load %arg7[%c0_15, %c0_16] : memref<392x6xf32, #tpu.memory_space<vmem>>, vector<392x6xf32>
    tpu.vector_store %arg7[%c0_15, %c0_16], %16 {strides = array<i32>} : memref<392x6xf32, #tpu.memory_space<vmem>>, vector<392x6xf32>,
    return
  }
  func.func @transform_0(%arg0: i32) -> (i32, i32) {
    %c0_i32 = arith.constant 0 : i32
    %c0_i32_0 = arith.constant 0 : i32
    return %arg0, %c0_i32 : i32, i32
  }
  func.func @transform_1(%arg0: i32) -> (i32, i32) {
    %c0_i32 = arith.constant 0 : i32
    %c0_i32_0 = arith.constant 0 : i32
    return %arg0, %c0_i32 : i32, i32
  }
  func.func @transform_2(%arg0: i32) -> (i32, i32) {
    %c0_i32 = arith.constant 0 : i32
    %c0_i32_0 = arith.constant 0 : i32
    return %arg0, %c0_i32 : i32, i32
  }
  func.func @transform_3(%arg0: i32) -> (i32, i32) {
    %c0_i32 = arith.constant 0 : i32
    %c0_i32_0 = arith.constant 0 : i32
    return %arg0, %c0_i32 : i32, i32
  }
  func.func @transform_4(%arg0: i32) -> (i32, i32) {
    %c0_i32 = arith.constant 0 : i32
    %c0_i32_0 = arith.constant 0 : i32
    %c0_i32_1 = arith.constant 0 : i32
    return %c0_i32, %c0_i32_0 : i32, i32
  }
  func.func @transform_5(%arg0: i32) -> (i32, i32) {
    %c0_i32 = arith.constant 0 : i32
    %c0_i32_0 = arith.constant 0 : i32
    %c0_i32_1 = arith.constant 0 : i32
    return %c0_i32, %c0_i32_0 : i32, i32
  }
  func.func @transform_6(%arg0: i32) -> (i32, i32) {
    %c0_i32 = arith.constant 0 : i32
    %c0_i32_0 = arith.constant 0 : i32
    return %arg0, %c0_i32 : i32, i32
  }
}

module attributes {stable_mosaic.version = 11 : i64} {
  func.func @_conv_relu_pool_kernel(%arg0: i32, %arg1: memref<56x150xf32, #tpu.memory_space<vmem>>, %arg2: memref<56x150xf32, #tpu.memory_space<vmem>>, %arg3: memref<56x150xf32, #tpu.memory_space<vmem>>, %arg4: memref<56x150xf32, #tpu.memory_space<vmem>>, %arg5: memref<150x16xf32, #tpu.memory_space<vmem>>, %arg6: memref<1x16xf32, #tpu.memory_space<vmem>>, %arg7: memref<56x16xf32, #tpu.memory_space<vmem>>) attributes {dimension_semantics = [#tpu.dimension_semantics<parallel>], iteration_bounds = array<i64: 1>, scalar_prefetch = 0 : i64, scratch_operands = 0 : i64, tpu.core_type = #tpu.core_type<tc>, window_params = [{transform_indices = @transform_0, window_bounds = array<i64: 56, 150>}, {transform_indices = @transform_1, window_bounds = array<i64: 56, 150>}, {transform_indices = @transform_2, window_bounds = array<i64: 56, 150>}, {transform_indices = @transform_3, window_bounds = array<i64: 56, 150>}, {pipeline_mode = #tpu.pipeline_mode<synchronous>, transform_indices = @transform_4, window_bounds = array<i64: 150, 16>}, {pipeline_mode = #tpu.pipeline_mode<synchronous>, transform_indices = @transform_5, window_bounds = array<i64: 1, 16>}, {transform_indices = @transform_6, window_bounds = array<i64: 56, 16>}]} {
    %c0 = arith.constant 0 : index
    %c0_0 = arith.constant 0 : index
    %0 = vector.load %arg5[%c0, %c0_0] : memref<150x16xf32, #tpu.memory_space<vmem>>, vector<150x16xf32>
    %c0_1 = arith.constant 0 : index
    %c0_2 = arith.constant 0 : index
    %1 = vector.load %arg1[%c0_1, %c0_2] : memref<56x150xf32, #tpu.memory_space<vmem>>, vector<56x150xf32>
    %cst = arith.constant dense<0.000000e+00> : vector<56x16xf32>
    %2 = tpu.matmul %1, %0, %cst {dimension_numbers = #tpu.dot_dimension_numbers<[1], [0], [0], [1], [0, 0, 1, 1], [], []>} : vector<56x150xf32>, vector<150x16xf32>, vector<56x16xf32> -> vector<56x16xf32>
    %c0_3 = arith.constant 0 : index
    %c0_4 = arith.constant 0 : index
    %3 = vector.load %arg2[%c0_3, %c0_4] : memref<56x150xf32, #tpu.memory_space<vmem>>, vector<56x150xf32>
    %cst_5 = arith.constant dense<0.000000e+00> : vector<56x16xf32>
    %4 = tpu.matmul %3, %0, %cst_5 {dimension_numbers = #tpu.dot_dimension_numbers<[1], [0], [0], [1], [0, 0, 1, 1], [], []>} : vector<56x150xf32>, vector<150x16xf32>, vector<56x16xf32> -> vector<56x16xf32>
    %5 = arith.maximumf %2, %4 : vector<56x16xf32>
    %c0_6 = arith.constant 0 : index
    %c0_7 = arith.constant 0 : index
    %6 = vector.load %arg3[%c0_6, %c0_7] : memref<56x150xf32, #tpu.memory_space<vmem>>, vector<56x150xf32>
    %cst_8 = arith.constant dense<0.000000e+00> : vector<56x16xf32>
    %7 = tpu.matmul %6, %0, %cst_8 {dimension_numbers = #tpu.dot_dimension_numbers<[1], [0], [0], [1], [0, 0, 1, 1], [], []>} : vector<56x150xf32>, vector<150x16xf32>, vector<56x16xf32> -> vector<56x16xf32>
    %8 = arith.maximumf %5, %7 : vector<56x16xf32>
    %c0_9 = arith.constant 0 : index
    %c0_10 = arith.constant 0 : index
    %9 = vector.load %arg4[%c0_9, %c0_10] : memref<56x150xf32, #tpu.memory_space<vmem>>, vector<56x150xf32>
    %cst_11 = arith.constant dense<0.000000e+00> : vector<56x16xf32>
    %10 = tpu.matmul %9, %0, %cst_11 {dimension_numbers = #tpu.dot_dimension_numbers<[1], [0], [0], [1], [0, 0, 1, 1], [], []>} : vector<56x150xf32>, vector<150x16xf32>, vector<56x16xf32> -> vector<56x16xf32>
    %11 = arith.maximumf %8, %10 : vector<56x16xf32>
    %c0_12 = arith.constant 0 : index
    %c0_13 = arith.constant 0 : index
    %12 = vector.load %arg6[%c0_12, %c0_13] : memref<1x16xf32, #tpu.memory_space<vmem>>, vector<1x16xf32>
    %13 = vector.broadcast %12 : vector<1x16xf32> to vector<56x16xf32>
    %14 = arith.addf %11, %13 : vector<56x16xf32>
    %cst_14 = arith.constant 0.000000e+00 : f32
    %15 = vector.broadcast %cst_14 : f32 to vector<56x16xf32>
    %16 = arith.maximumf %14, %15 : vector<56x16xf32>
    %c0_15 = arith.constant 0 : index
    %c0_16 = arith.constant 0 : index
    %17 = vector.load %arg7[%c0_15, %c0_16] : memref<56x16xf32, #tpu.memory_space<vmem>>, vector<56x16xf32>
    tpu.vector_store %arg7[%c0_15, %c0_16], %16 {strides = array<i32>} : memref<56x16xf32, #tpu.memory_space<vmem>>, vector<56x16xf32>,
    return
  }
  func.func @transform_0(%arg0: i32) -> (i32, i32) {
    %c0_i32 = arith.constant 0 : i32
    %c0_i32_0 = arith.constant 0 : i32
    return %arg0, %c0_i32 : i32, i32
  }
  func.func @transform_1(%arg0: i32) -> (i32, i32) {
    %c0_i32 = arith.constant 0 : i32
    %c0_i32_0 = arith.constant 0 : i32
    return %arg0, %c0_i32 : i32, i32
  }
  func.func @transform_2(%arg0: i32) -> (i32, i32) {
    %c0_i32 = arith.constant 0 : i32
    %c0_i32_0 = arith.constant 0 : i32
    return %arg0, %c0_i32 : i32, i32
  }
  func.func @transform_3(%arg0: i32) -> (i32, i32) {
    %c0_i32 = arith.constant 0 : i32
    %c0_i32_0 = arith.constant 0 : i32
    return %arg0, %c0_i32 : i32, i32
  }
  func.func @transform_4(%arg0: i32) -> (i32, i32) {
    %c0_i32 = arith.constant 0 : i32
    %c0_i32_0 = arith.constant 0 : i32
    %c0_i32_1 = arith.constant 0 : i32
    return %c0_i32, %c0_i32_0 : i32, i32
  }
  func.func @transform_5(%arg0: i32) -> (i32, i32) {
    %c0_i32 = arith.constant 0 : i32
    %c0_i32_0 = arith.constant 0 : i32
    %c0_i32_1 = arith.constant 0 : i32
    return %c0_i32, %c0_i32_0 : i32, i32
  }
  func.func @transform_6(%arg0: i32) -> (i32, i32) {
    %c0_i32 = arith.constant 0 : i32
    %c0_i32_0 = arith.constant 0 : i32
    return %arg0, %c0_i32 : i32, i32
  }
}

module attributes {stable_mosaic.version = 11 : i64} {
  func.func @_mlp_kernel(%arg0: i32, %arg1: memref<8x400xf32, #tpu.memory_space<vmem>>, %arg2: memref<400x120xf32, #tpu.memory_space<vmem>>, %arg3: memref<1x120xf32, #tpu.memory_space<vmem>>, %arg4: memref<120x84xf32, #tpu.memory_space<vmem>>, %arg5: memref<1x84xf32, #tpu.memory_space<vmem>>, %arg6: memref<84x10xf32, #tpu.memory_space<vmem>>, %arg7: memref<1x10xf32, #tpu.memory_space<vmem>>, %arg8: memref<8x10xf32, #tpu.memory_space<vmem>>) attributes {dimension_semantics = [#tpu.dimension_semantics<parallel>], iteration_bounds = array<i64: 1>, scalar_prefetch = 0 : i64, scratch_operands = 0 : i64, tpu.core_type = #tpu.core_type<tc>, window_params = [{transform_indices = @transform_0, window_bounds = array<i64: 8, 400>}, {pipeline_mode = #tpu.pipeline_mode<synchronous>, transform_indices = @transform_1, window_bounds = array<i64: 400, 120>}, {pipeline_mode = #tpu.pipeline_mode<synchronous>, transform_indices = @transform_2, window_bounds = array<i64: 1, 120>}, {pipeline_mode = #tpu.pipeline_mode<synchronous>, transform_indices = @transform_3, window_bounds = array<i64: 120, 84>}, {pipeline_mode = #tpu.pipeline_mode<synchronous>, transform_indices = @transform_4, window_bounds = array<i64: 1, 84>}, {pipeline_mode = #tpu.pipeline_mode<synchronous>, transform_indices = @transform_5, window_bounds = array<i64: 84, 10>}, {pipeline_mode = #tpu.pipeline_mode<synchronous>, transform_indices = @transform_6, window_bounds = array<i64: 1, 10>}, {transform_indices = @transform_7, window_bounds = array<i64: 8, 10>}]} {
    %c0 = arith.constant 0 : index
    %c0_0 = arith.constant 0 : index
    %0 = vector.load %arg1[%c0, %c0_0] : memref<8x400xf32, #tpu.memory_space<vmem>>, vector<8x400xf32>
    %c0_1 = arith.constant 0 : index
    %c0_2 = arith.constant 0 : index
    %1 = vector.load %arg2[%c0_1, %c0_2] : memref<400x120xf32, #tpu.memory_space<vmem>>, vector<400x120xf32>
    %cst = arith.constant dense<0.000000e+00> : vector<8x120xf32>
    %2 = tpu.matmul %0, %1, %cst {dimension_numbers = #tpu.dot_dimension_numbers<[1], [0], [0], [1], [0, 0, 1, 1], [], []>} : vector<8x400xf32>, vector<400x120xf32>, vector<8x120xf32> -> vector<8x120xf32>
    %c0_3 = arith.constant 0 : index
    %c0_4 = arith.constant 0 : index
    %3 = vector.load %arg3[%c0_3, %c0_4] : memref<1x120xf32, #tpu.memory_space<vmem>>, vector<1x120xf32>
    %4 = vector.broadcast %3 : vector<1x120xf32> to vector<8x120xf32>
    %5 = arith.addf %2, %4 : vector<8x120xf32>
    %cst_5 = arith.constant 0.000000e+00 : f32
    %6 = vector.broadcast %cst_5 : f32 to vector<8x120xf32>
    %7 = arith.maximumf %5, %6 : vector<8x120xf32>
    %c0_6 = arith.constant 0 : index
    %c0_7 = arith.constant 0 : index
    %8 = vector.load %arg4[%c0_6, %c0_7] : memref<120x84xf32, #tpu.memory_space<vmem>>, vector<120x84xf32>
    %cst_8 = arith.constant dense<0.000000e+00> : vector<8x84xf32>
    %9 = tpu.matmul %7, %8, %cst_8 {dimension_numbers = #tpu.dot_dimension_numbers<[1], [0], [0], [1], [0, 0, 1, 1], [], []>} : vector<8x120xf32>, vector<120x84xf32>, vector<8x84xf32> -> vector<8x84xf32>
    %c0_9 = arith.constant 0 : index
    %c0_10 = arith.constant 0 : index
    %10 = vector.load %arg5[%c0_9, %c0_10] : memref<1x84xf32, #tpu.memory_space<vmem>>, vector<1x84xf32>
    %11 = vector.broadcast %10 : vector<1x84xf32> to vector<8x84xf32>
    %12 = arith.addf %9, %11 : vector<8x84xf32>
    %cst_11 = arith.constant 0.000000e+00 : f32
    %13 = vector.broadcast %cst_11 : f32 to vector<8x84xf32>
    %14 = arith.maximumf %12, %13 : vector<8x84xf32>
    %c0_12 = arith.constant 0 : index
    %c0_13 = arith.constant 0 : index
    %15 = vector.load %arg6[%c0_12, %c0_13] : memref<84x10xf32, #tpu.memory_space<vmem>>, vector<84x10xf32>
    %cst_14 = arith.constant dense<0.000000e+00> : vector<8x10xf32>
    %16 = tpu.matmul %14, %15, %cst_14 {dimension_numbers = #tpu.dot_dimension_numbers<[1], [0], [0], [1], [0, 0, 1, 1], [], []>} : vector<8x84xf32>, vector<84x10xf32>, vector<8x10xf32> -> vector<8x10xf32>
    %c0_15 = arith.constant 0 : index
    %c0_16 = arith.constant 0 : index
    %17 = vector.load %arg7[%c0_15, %c0_16] : memref<1x10xf32, #tpu.memory_space<vmem>>, vector<1x10xf32>
    %18 = vector.broadcast %17 : vector<1x10xf32> to vector<8x10xf32>
    %19 = arith.addf %16, %18 : vector<8x10xf32>
    %c0_17 = arith.constant 0 : index
    %c0_18 = arith.constant 0 : index
    %20 = vector.load %arg8[%c0_17, %c0_18] : memref<8x10xf32, #tpu.memory_space<vmem>>, vector<8x10xf32>
    tpu.vector_store %arg8[%c0_17, %c0_18], %19 {strides = array<i32>} : memref<8x10xf32, #tpu.memory_space<vmem>>, vector<8x10xf32>,
    return
  }
  func.func @transform_0(%arg0: i32) -> (i32, i32) {
    %c0_i32 = arith.constant 0 : i32
    %c0_i32_0 = arith.constant 0 : i32
    return %arg0, %c0_i32 : i32, i32
  }
  func.func @transform_1(%arg0: i32) -> (i32, i32) {
    %c0_i32 = arith.constant 0 : i32
    %c0_i32_0 = arith.constant 0 : i32
    %c0_i32_1 = arith.constant 0 : i32
    return %c0_i32, %c0_i32_0 : i32, i32
  }
  func.func @transform_2(%arg0: i32) -> (i32, i32) {
    %c0_i32 = arith.constant 0 : i32
    %c0_i32_0 = arith.constant 0 : i32
    %c0_i32_1 = arith.constant 0 : i32
    return %c0_i32, %c0_i32_0 : i32, i32
  }
  func.func @transform_3(%arg0: i32) -> (i32, i32) {
    %c0_i32 = arith.constant 0 : i32
    %c0_i32_0 = arith.constant 0 : i32
    %c0_i32_1 = arith.constant 0 : i32
    return %c0_i32, %c0_i32_0 : i32, i32
  }
  func.func @transform_4(%arg0: i32) -> (i32, i32) {
    %c0_i32 = arith.constant 0 : i32
    %c0_i32_0 = arith.constant 0 : i32
    %c0_i32_1 = arith.constant 0 : i32
    return %c0_i32, %c0_i32_0 : i32, i32
  }
  func.func @transform_5(%arg0: i32) -> (i32, i32) {
    %c0_i32 = arith.constant 0 : i32
    %c0_i32_0 = arith.constant 0 : i32
    %c0_i32_1 = arith.constant 0 : i32
    return %c0_i32, %c0_i32_0 : i32, i32
  }
  func.func @transform_6(%arg0: i32) -> (i32, i32) {
    %c0_i32 = arith.constant 0 : i32
    %c0_i32_0 = arith.constant 0 : i32
    %c0_i32_1 = arith.constant 0 : i32
    return %c0_i32, %c0_i32_0 : i32, i32
  }
  func.func @transform_7(%arg0: i32) -> (i32, i32) {
    %c0_i32 = arith.constant 0 : i32
    %c0_i32_0 = arith.constant 0 : i32
    return %arg0, %c0_i32 : i32, i32
  }
}

</mosaic_0001>

<llo_original>
// kernel: net_forward.3
$region0: #{net_forward.3}
  #allocation0 [shape = 'u32[]', space=smem, size = 0x4, offset = 0x4, fixed_abs, tag = 'smem constant byte address 0x4 - core index']
  #allocation1 [shape = 'u32[72,128]{1,0:T(1,128)}', space=vmem, size = 0x9000, scoped, tag = 'internal scratch']
  %s0 = inlined_call_operand.vmem [shape: f32[392,25], index: 0, kind: input, shape index: {}]
  %s1 = inlined_call_operand.vmem [shape: f32[392,25], index: 1, kind: input, shape index: {}]
  %s2 = inlined_call_operand.vmem [shape: f32[392,25], index: 2, kind: input, shape index: {}]
  %s3 = inlined_call_operand.vmem [shape: f32[392,25], index: 3, kind: input, shape index: {}]
  %s4 = inlined_call_operand.vmem [shape: f32[25,6], index: 4, kind: input, shape index: {}]
  %s5 = inlined_call_operand.vmem [shape: f32[1,6], index: 5, kind: input, shape index: {}]
  %s6 = inlined_call_operand.vmem [shape: f32[392,6], index: 6, kind: output, shape index: {}]
  %s7 = sld [smem:[#allocation0]]
  $region34: #{net_forward.3} parent=0
    _
  %s9 = ssub.s32 1, %s7
  %s10 = scalar_select 0, %s9, %s7
  // Predicated region
  $region2: #{net_forward.3} parent=0 // pred_check
    _
  $region3: #{net_forward.3} parent=0 // pred_check_branch
    %12 = sbr.rel (0) target = $region5
  $region4: #{net_forward.3} parent=0 // pred_region
    _
  $region5: #{net_forward.3} parent=0 // pred_fallthru
    _
  // Predicated region
  $region6: #{net_forward.3} parent=0 // pred_check
    _
  $region7: #{net_forward.3} parent=0 // pred_check_branch
    %14 = sbr.rel (0) target = $region9
  $region8: #{net_forward.3} parent=0 // pred_region
    _
  $region9: #{net_forward.3} parent=0 // pred_fallthru
    _
  // Predicated region
  $region10: #{net_forward.3} parent=0 // pred_check
    _
  $region11: #{net_forward.3} parent=0 // pred_check_branch
    %16 = sbr.rel (0) target = $region13
  $region12: #{net_forward.3} parent=0 // pred_region
    _
  $region13: #{net_forward.3} parent=0 // pred_fallthru
    _
  // Predicated region
  $region14: #{net_forward.3} parent=0 // pred_check
    _
  $region15: #{net_forward.3} parent=0 // pred_check_branch
    %18 = sbr.rel (0) target = $region17
  $region16: #{net_forward.3} parent=0 // pred_region
    _
  $region17: #{net_forward.3} parent=0 // pred_fallthru
    _
  // Predicated region
  $region18: #{net_forward.3} parent=0 // pred_check
    _
  $region19: #{net_forward.3} parent=0 // pred_check_branch
    %20 = sbr.rel (0) target = $region21
  $region20: #{net_forward.3} parent=0 // pred_region
    _
  $region21: #{net_forward.3} parent=0 // pred_fallthru
    _
  // Predicated region
  $region22: #{net_forward.3} parent=0 // pred_check
    _
  $region23: #{net_forward.3} parent=0 // pred_check_branch
    %22 = sbr.rel (0) target = $region25
  $region24: #{net_forward.3} parent=0 // pred_region
    _
  $region25: #{net_forward.3} parent=0 // pred_fallthru
    _
  %v23 = vld [vmem:[%s4] sm:$0xff]
  %v24 = vld [vmem:[%s4 + $0x8] sm:$0xff]
  %v25 = vld [vmem:[%s4 + $0x10] sm:$0xff]
  %v26 = vld [vmem:[%s4 + $0x18] sm:$0x1]
  %v27 = vld [vmem:[%s0] sm:$0xff]
  %v28 = vld [vmem:[%s0 + $0x8] sm:$0xff]
  %v29 = vld [vmem:[%s0 + $0x10] sm:$0xff]
  %v30 = vld [vmem:[%s0 + $0x18] sm:$0xff]
  %v31 = vld [vmem:[%s0 + $0x20] sm:$0xff]
  %v32 = vld [vmem:[%s0 + $0x28] sm:$0xff]
  %v33 = vld [vmem:[%s0 + $0x30] sm:$0xff]
  %v34 = vld [vmem:[%s0 + $0x38] sm:$0xff]
  %v35 = vld [vmem:[%s0 + $0x40] sm:$0xff]
  %v36 = vld [vmem:[%s0 + $0x48] sm:$0xff]
  %v37 = vld [vmem:[%s0 + $0x50] sm:$0xff]
  %v38 = vld [vmem:[%s0 + $0x58] sm:$0xff]
  %v39 = vld [vmem:[%s0 + $0x60] sm:$0xff]
  %v40 = vld [vmem:[%s0 + $0x68] sm:$0xff]
  %v41 = vld [vmem:[%s0 + $0x70] sm:$0xff]
  %v42 = vld [vmem:[%s0 + $0x78] sm:$0xff]
  %v43 = vld [vmem:[%s0 + $0x80] sm:$0xff]
  %v44 = vld [vmem:[%s0 + $0x88] sm:$0xff]
  %v45 = vld [vmem:[%s0 + $0x90] sm:$0xff]
  %v46 = vld [vmem:[%s0 + $0x98] sm:$0xff]
  %v47 = vld [vmem:[%s0 + $0xa0] sm:$0xff]
  %v48 = vld [vmem:[%s0 + $0xa8] sm:$0xff]
  %v49 = vld [vmem:[%s0 + $0xb0] sm:$0xff]
  %v50 = vld [vmem:[%s0 + $0xb8] sm:$0xff]
  %v51 = vld [vmem:[%s0 + $0xc0] sm:$0xff]
  %v52 = vld [vmem:[%s0 + $0xc8] sm:$0xff]
  %v53 = vld [vmem:[%s0 + $0xd0] sm:$0xff]
  %v54 = vld [vmem:[%s0 + $0xd8] sm:$0xff]
  %v55 = vld [vmem:[%s0 + $0xe0] sm:$0xff]
  %v56 = vld [vmem:[%s0 + $0xe8] sm:$0xff]
  %v57 = vld [vmem:[%s0 + $0xf0] sm:$0xff]
  %v58 = vld [vmem:[%s0 + $0xf8] sm:$0xff]
  %v59 = vld [vmem:[%s0 + $0x100] sm:$0xff]
  %v60 = vld [vmem:[%s0 + $0x108] sm:$0xff]
  %v61 = vld [vmem:[%s0 + $0x110] sm:$0xff]
  %v62 = vld [vmem:[%s0 + $0x118] sm:$0xff]
  %v63 = vld [vmem:[%s0 + $0x120] sm:$0xff]
  %v64 = vld [vmem:[%s0 + $0x128] sm:$0xff]
  %v65 = vld [vmem:[%s0 + $0x130] sm:$0xff]
  %v66 = vld [vmem:[%s0 + $0x138] sm:$0xff]
  %v67 = vld [vmem:[%s0 + $0x140] sm:$0xff]
  %v68 = vld [vmem:[%s0 + $0x148] sm:$0xff]
  %v69 = vld [vmem:[%s0 + $0x150] sm:$0xff]
  %v70 = vld [vmem:[%s0 + $0x158] sm:$0xff]
  %v71 = vld [vmem:[%s0 + $0x160] sm:$0xff]
  %v72 = vld [vmem:[%s0 + $0x168] sm:$0xff]
  %v73 = vld [vmem:[%s0 + $0x170] sm:$0xff]
  %v74 = vld [vmem:[%s0 + $0x178] sm:$0xff]
  %v75 = vld [vmem:[%s0 + $0x180] sm:$0xff]
  %vm76 = vcmask 203776
  %v78 = vsel %vm76, %v27, 0
  %v81 = vsel %vm76, %v28, 0
  %v84 = vsel %vm76, %v29, 0
  %v87 = vsel %vm76, %v30, 0
  %v90 = vsel %vm76, %v31, 0
  %v93 = vsel %vm76, %v32, 0
  %v96 = vsel %vm76, %v33, 0
  %v99 = vsel %vm76, %v34, 0
  %v102 = vsel %vm76, %v35, 0
  %v105 = vsel %vm76, %v36, 0
  %v108 = vsel %vm76, %v37, 0
  %v111 = vsel %vm76, %v38, 0
  %v114 = vsel %vm76, %v39, 0
  %v117 = vsel %vm76, %v40, 0
  %v120 = vsel %vm76, %v41, 0
  %v123 = vsel %vm76, %v42, 0
  %v126 = vsel %vm76, %v43, 0
  %v129 = vsel %vm76, %v44, 0
  %v132 = vsel %vm76, %v45, 0
  %v135 = vsel %vm76, %v46, 0
  %v138 = vsel %vm76, %v47, 0
  %v141 = vsel %vm76, %v48, 0
  %v144 = vsel %vm76, %v49, 0
  %v147 = vsel %vm76, %v50, 0
  %v150 = vsel %vm76, %v51, 0
  %v153 = vsel %vm76, %v52, 0
  %v156 = vsel %vm76, %v53, 0
  %v159 = vsel %vm76, %v54, 0
  %v162 = vsel %vm76, %v55, 0
  %v165 = vsel %vm76, %v56, 0
  %v168 = vsel %vm76, %v57, 0
  %v171 = vsel %vm76, %v58, 0
  %v174 = vsel %vm76, %v59, 0
  %v177 = vsel %vm76, %v60, 0
  %v180 = vsel %vm76, %v61, 0
  %v183 = vsel %vm76, %v62, 0
  %v186 = vsel %vm76, %v63, 0
  %v189 = vsel %vm76, %v64, 0
  %v192 = vsel %vm76, %v65, 0
  %v195 = vsel %vm76, %v66, 0
  %v198 = vsel %vm76, %v67, 0
  %v201 = vsel %vm76, %v68, 0
  %v204 = vsel %vm76, %v69, 0
  %v207 = vsel %vm76, %v70, 0
  %v210 = vsel %vm76, %v71, 0
  %v213 = vsel %vm76, %v72, 0
  %v216 = vsel %vm76, %v73, 0
  %v219 = vsel %vm76, %v74, 0
  %v222 = vsel %vm76, %v75, 0
  %vm224 = vcmask 1040384
  %v226 = vsel %vm224, %v26, 0
  %228 = vmatpush.msra.mxu0 0.0
  %229 = vmatpush.msra.mxu0 0.0
  %230 = vmatpush.msra.mxu0 0.0
  %231 = vmatpush.msra.mxu0 0.0
  %232 = vmatpush.msra.mxu0 0.0
  %233 = vmatpush.msra.mxu0 0.0
  %234 = vmatpush.msra.mxu0 0.0
  %235 = vmatpush.msra.mxu0 0.0
  %236 = vmatpush.msra.mxu0 0.0
  %237 = vmatpush.msra.mxu0 0.0
  %238 = vmatpush.msra.mxu0 0.0
  %239 = vmatpush.msra.mxu0 0.0
  %240 = vmatpush.msra.mxu0 %v226
  %241 = vmatpush.msra.mxu0 %v25
  %242 = vmatpush.msra.mxu0 %v24
  %243 = vmatpush.msra.mxu0 %v23
  %244 = vmatmul.f32.gmra.mxu0 %v78
  %v245 = vpop.f32.mrf.mxu0
  %v246 = vadd.f32 0.0, %v245
  %247 = vmatmul.f32.gmra.mxu0 %v81
  %v248 = vpop.f32.mrf.mxu0
  %v249 = vadd.f32 0.0, %v248
  %250 = vmatmul.f32.gmra.mxu0 %v84
  %v251 = vpop.f32.mrf.mxu0
  %v252 = vadd.f32 0.0, %v251
  %253 = vmatmul.f32.gmra.mxu0 %v87
  %v254 = vpop.f32.mrf.mxu0
  %v255 = vadd.f32 0.0, %v254
  %256 = vmatmul.f32.gmra.mxu0 %v90
  %v257 = vpop.f32.mrf.mxu0
  %v258 = vadd.f32 0.0, %v257
  %259 = vmatmul.f32.gmra.mxu0 %v93
  %v260 = vpop.f32.mrf.mxu0
  %v261 = vadd.f32 0.0, %v260
  %262 = vmatmul.f32.gmra.mxu0 %v96
  %v263 = vpop.f32.mrf.mxu0
  %v264 = vadd.f32 0.0, %v263
  %265 = vmatmul.f32.gmra.mxu0 %v99
  %v266 = vpop.f32.mrf.mxu0
  %v267 = vadd.f32 0.0, %v266
  %268 = vmatmul.f32.gmra.mxu0 %v102
  %v269 = vpop.f32.mrf.mxu0
  %v270 = vadd.f32 0.0, %v269
  %271 = vmatmul.f32.gmra.mxu0 %v105
  %v272 = vpop.f32.mrf.mxu0
  %v273 = vadd.f32 0.0, %v272
  %274 = vmatmul.f32.gmra.mxu0 %v108
  %v275 = vpop.f32.mrf.mxu0
  %v276 = vadd.f32 0.0, %v275
  %277 = vmatmul.f32.gmra.mxu0 %v111
  %v278 = vpop.f32.mrf.mxu0
  %v279 = vadd.f32 0.0, %v278
  %280 = vmatmul.f32.gmra.mxu0 %v114
  %v281 = vpop.f32.mrf.mxu0
  %v282 = vadd.f32 0.0, %v281
  %283 = vmatmul.f32.gmra.mxu0 %v117
  %v284 = vpop.f32.mrf.mxu0
  %v285 = vadd.f32 0.0, %v284
  %286 = vmatmul.f32.gmra.mxu0 %v120
  %v287 = vpop.f32.mrf.mxu0
  %v288 = vadd.f32 0.0, %v287
  %289 = vmatmul.f32.gmra.mxu0 %v123
  %v290 = vpop.f32.mrf.mxu0
  %v291 = vadd.f32 0.0, %v290
  %292 = vmatmul.f32.gmra.mxu0 %v126
  %v293 = vpop.f32.mrf.mxu0
  %v294 = vadd.f32 0.0, %v293
  %295 = vmatmul.f32.gmra.mxu0 %v129
  %v296 = vpop.f32.mrf.mxu0
  %v297 = vadd.f32 0.0, %v296
  %298 = vmatmul.f32.gmra.mxu0 %v132
  %v299 = vpop.f32.mrf.mxu0
  %v300 = vadd.f32 0.0, %v299
  %301 = vmatmul.f32.gmra.mxu0 %v135
  %v302 = vpop.f32.mrf.mxu0
  %v303 = vadd.f32 0.0, %v302
  %304 = vmatmul.f32.gmra.mxu0 %v138
  %v305 = vpop.f32.mrf.mxu0
  %v306 = vadd.f32 0.0, %v305
  %307 = vmatmul.f32.gmra.mxu0 %v141
  %v308 = vpop.f32.mrf.mxu0
  %v309 = vadd.f32 0.0, %v308
  %310 = vmatmul.f32.gmra.mxu0 %v144
  %v311 = vpop.f32.mrf.mxu0
  %v312 = vadd.f32 0.0, %v311
  %313 = vmatmul.f32.gmra.mxu0 %v147
  %v314 = vpop.f32.mrf.mxu0
  %v315 = vadd.f32 0.0, %v314
  %316 = vmatmul.f32.gmra.mxu0 %v150
  %v317 = vpop.f32.mrf.mxu0
  %v318 = vadd.f32 0.0, %v317
  %319 = vmatmul.f32.gmra.mxu0 %v153
  %v320 = vpop.f32.mrf.mxu0
  %v321 = vadd.f32 0.0, %v320
  %322 = vmatmul.f32.gmra.mxu0 %v156
  %v323 = vpop.f32.mrf.mxu0
  %v324 = vadd.f32 0.0, %v323
  %325 = vmatmul.f32.gmra.mxu0 %v159
  %v326 = vpop.f32.mrf.mxu0
  %v327 = vadd.f32 0.0, %v326
  %328 = vmatmul.f32.gmra.mxu0 %v162
  %v329 = vpop.f32.mrf.mxu0
  %v330 = vadd.f32 0.0, %v329
  %331 = vmatmul.f32.gmra.mxu0 %v165
  %v332 = vpop.f32.mrf.mxu0
  %v333 = vadd.f32 0.0, %v332
  %334 = vmatmul.f32.gmra.mxu0 %v168
  %v335 = vpop.f32.mrf.mxu0
  %v336 = vadd.f32 0.0, %v335
  %337 = vmatmul.f32.gmra.mxu0 %v171
  %v338 = vpop.f32.mrf.mxu0
  %v339 = vadd.f32 0.0, %v338
  %340 = vmatmul.f32.gmra.mxu0 %v174
  %v341 = vpop.f32.mrf.mxu0
  %v342 = vadd.f32 0.0, %v341
  %343 = vmatmul.f32.gmra.mxu0 %v177
  %v344 = vpop.f32.mrf.mxu0
  %v345 = vadd.f32 0.0, %v344
  %346 = vmatmul.f32.gmra.mxu0 %v180
  %v347 = vpop.f32.mrf.mxu0
  %v348 = vadd.f32 0.0, %v347
  %349 = vmatmul.f32.gmra.mxu0 %v183
  %v350 = vpop.f32.mrf.mxu0
  %v351 = vadd.f32 0.0, %v350
  %352 = vmatmul.f32.gmra.mxu0 %v186
  %v353 = vpop.f32.mrf.mxu0
  %v354 = vadd.f32 0.0, %v353
  %355 = vmatmul.f32.gmra.mxu0 %v189
  %v356 = vpop.f32.mrf.mxu0
  %v357 = vadd.f32 0.0, %v356
  %358 = vmatmul.f32.gmra.mxu0 %v192
  %v359 = vpop.f32.mrf.mxu0
  %v360 = vadd.f32 0.0, %v359
  %361 = vmatmul.f32.gmra.mxu0 %v195
  %v362 = vpop.f32.mrf.mxu0
  %v363 = vadd.f32 0.0, %v362
  %364 = vmatmul.f32.gmra.mxu0 %v198
  %v365 = vpop.f32.mrf.mxu0
  %v366 = vadd.f32 0.0, %v365
  %367 = vmatmul.f32.gmra.mxu0 %v201
  %v368 = vpop.f32.mrf.mxu0
  %v369 = vadd.f32 0.0, %v368
  %370 = vmatmul.f32.gmra.mxu0 %v204
  %v371 = vpop.f32.mrf.mxu0
  %v372 = vadd.f32 0.0, %v371
  %373 = vmatmul.f32.gmra.mxu0 %v207
  %v374 = vpop.f32.mrf.mxu0
  %v375 = vadd.f32 0.0, %v374
  %376 = vmatmul.f32.gmra.mxu0 %v210
  %v377 = vpop.f32.mrf.mxu0
  %v378 = vadd.f32 0.0, %v377
  %379 = vmatmul.f32.gmra.mxu0 %v213
  %v380 = vpop.f32.mrf.mxu0
  %v381 = vadd.f32 0.0, %v380
  %382 = vmatmul.f32.gmra.mxu0 %v216
  %v383 = vpop.f32.mrf.mxu0
  %v384 = vadd.f32 0.0, %v383
  %385 = vmatmul.f32.gmra.mxu0 %v219
  %v386 = vpop.f32.mrf.mxu0
  %v387 = vadd.f32 0.0, %v386
  %388 = vmatmul.f32.gmra.mxu0 %v222
  %v389 = vpop.f32.mrf.mxu0
  %v390 = vadd.f32 0.0, %v389
  %391 = vdwg.mxu0
  %v392 = vld [vmem:[%s1] sm:$0xff]
  %v393 = vld [vmem:[%s1 + $0x8] sm:$0xff]
  %v394 = vld [vmem:[%s1 + $0x10] sm:$0xff]
  %v395 = vld [vmem:[%s1 + $0x18] sm:$0xff]
  %v396 = vld [vmem:[%s1 + $0x20] sm:$0xff]
  %v397 = vld [vmem:[%s1 + $0x28] sm:$0xff]
  %v398 = vld [vmem:[%s1 + $0x30] sm:$0xff]
  %v399 = vld [vmem:[%s1 + $0x38] sm:$0xff]
  %v400 = vld [vmem:[%s1 + $0x40] sm:$0xff]
  %v401 = vld [vmem:[%s1 + $0x48] sm:$0xff]
  %v402 = vld [vmem:[%s1 + $0x50] sm:$0xff]
  %v403 = vld [vmem:[%s1 + $0x58] sm:$0xff]
  %v404 = vld [vmem:[%s1 + $0x60] sm:$0xff]
  %v405 = vld [vmem:[%s1 + $0x68] sm:$0xff]
  %v406 = vld [vmem:[%s1 + $0x70] sm:$0xff]
  %v407 = vld [vmem:[%s1 + $0x78] sm:$0xff]
  %v408 = vld [vmem:[%s1 + $0x80] sm:$0xff]
  %v409 = vld [vmem:[%s1 + $0x88] sm:$0xff]
  %v410 = vld [vmem:[%s1 + $0x90] sm:$0xff]
  %v411 = vld [vmem:[%s1 + $0x98] sm:$0xff]
  %v412 = vld [vmem:[%s1 + $0xa0] sm:$0xff]
  %v413 = vld [vmem:[%s1 + $0xa8] sm:$0xff]
  %v414 = vld [vmem:[%s1 + $0xb0] sm:$0xff]
  %v415 = vld [vmem:[%s1 + $0xb8] sm:$0xff]
  %v416 = vld [vmem:[%s1 + $0xc0] sm:$0xff]
  %v417 = vld [vmem:[%s1 + $0xc8] sm:$0xff]
  %v418 = vld [vmem:[%s1 + $0xd0] sm:$0xff]
  %v419 = vld [vmem:[%s1 + $0xd8] sm:$0xff]
  %v420 = vld [vmem:[%s1 + $0xe0] sm:$0xff]
  %v421 = vld [vmem:[%s1 + $0xe8] sm:$0xff]
  %v422 = vld [vmem:[%s1 + $0xf0] sm:$0xff]
  %v423 = vld [vmem:[%s1 + $0xf8] sm:$0xff]
  %v424 = vld [vmem:[%s1 + $0x100] sm:$0xff]
  %v425 = vld [vmem:[%s1 + $0x108] sm:$0xff]
  %v426 = vld [vmem:[%s1 + $0x110] sm:$0xff]
  %v427 = vld [vmem:[%s1 + $0x118] sm:$0xff]
  %v428 = vld [vmem:[%s1 + $0x120] sm:$0xff]
  %v429 = vld [vmem:[%s1 + $0x128] sm:$0xff]
  %v430 = vld [vmem:[%s1 + $0x130] sm:$0xff]
  %v431 = vld [vmem:[%s1 + $0x138] sm:$0xff]
  %v432 = vld [vmem:[%s1 + $0x140] sm:$0xff]
  %v433 = vld [vmem:[%s1 + $0x148] sm:$0xff]
  %v434 = vld [vmem:[%s1 + $0x150] sm:$0xff]
  %v435 = vld [vmem:[%s1 + $0x158] sm:$0xff]
  %v436 = vld [vmem:[%s1 + $0x160] sm:$0xff]
  %v437 = vld [vmem:[%s1 + $0x168] sm:$0xff]
  %v438 = vld [vmem:[%s1 + $0x170] sm:$0xff]
  %v439 = vld [vmem:[%s1 + $0x178] sm:$0xff]
  %v440 = vld [vmem:[%s1 + $0x180] sm:$0xff]
  %v442 = vsel %vm76, %v392, 0
  %v445 = vsel %vm76, %v393, 0
  %v448 = vsel %vm76, %v394, 0
  %v451 = vsel %vm76, %v395, 0
  %v454 = vsel %vm76, %v396, 0
  %v457 = vsel %vm76, %v397, 0
  %v460 = vsel %vm76, %v398, 0
  %v463 = vsel %vm76, %v399, 0
  %v466 = vsel %vm76, %v400, 0
  %v469 = vsel %vm76, %v401, 0
  %v472 = vsel %vm76, %v402, 0
  %v475 = vsel %vm76, %v403, 0
  %v478 = vsel %vm76, %v404, 0
  %v481 = vsel %vm76, %v405, 0
  %v484 = vsel %vm76, %v406, 0
  %v487 = vsel %vm76, %v407, 0
  %v490 = vsel %vm76, %v408, 0
  %v493 = vsel %vm76, %v409, 0
  %v496 = vsel %vm76, %v410, 0
  %v499 = vsel %vm76, %v411, 0
  %v502 = vsel %vm76, %v412, 0
  %v505 = vsel %vm76, %v413, 0
  %v508 = vsel %vm76, %v414, 0
  %v511 = vsel %vm76, %v415, 0
  %v514 = vsel %vm76, %v416, 0
  %v517 = vsel %vm76, %v417, 0
  %v520 = vsel %vm76, %v418, 0
  %v523 = vsel %vm76, %v419, 0
  %v526 = vsel %vm76, %v420, 0
  %v529 = vsel %vm76, %v421, 0
  %v532 = vsel %vm76, %v422, 0
  %v535 = vsel %vm76, %v423, 0
  %v538 = vsel %vm76, %v424, 0
  %v541 = vsel %vm76, %v425, 0
  %v544 = vsel %vm76, %v426, 0
  %v547 = vsel %vm76, %v427, 0
  %v550 = vsel %vm76, %v428, 0
  %v553 = vsel %vm76, %v429, 0
  %v556 = vsel %vm76, %v430, 0
  %v559 = vsel %vm76, %v431, 0
  %v562 = vsel %vm76, %v432, 0
  %v565 = vsel %vm76, %v433, 0
  %v568 = vsel %vm76, %v434, 0
  %v571 = vsel %vm76, %v435, 0
  %v574 = vsel %vm76, %v436, 0
  %v577 = vsel %vm76, %v437, 0
  %v580 = vsel %vm76, %v438, 0
  %v583 = vsel %vm76, %v439, 0
  %v586 = vsel %vm76, %v440, 0
  %588 = vmatpush.msra.mxu0 0.0
  %589 = vmatpush.msra.mxu0 0.0
  %590 = vmatpush.msra.mxu0 0.0
  %591 = vmatpush.msra.mxu0 0.0
  %592 = vmatpush.msra.mxu0 0.0
  %593 = vmatpush.msra.mxu0 0.0
  %594 = vmatpush.msra.mxu0 0.0
  %595 = vmatpush.msra.mxu0 0.0
  %596 = vmatpush.msra.mxu0 0.0
  %597 = vmatpush.msra.mxu0 0.0
  %598 = vmatpush.msra.mxu0 0.0
  %599 = vmatpush.msra.mxu0 0.0
  %600 = vmatpush.msra.mxu0 %v226
  %601 = vmatpush.msra.mxu0 %v25
  %602 = vmatpush.msra.mxu0 %v24
  %603 = vmatpush.msra.mxu0 %v23
  %604 = vmatmul.f32.gmra.mxu0 %v442
  %v605 = vpop.f32.mrf.mxu0
  %v606 = vadd.f32 0.0, %v605
  %607 = vmatmul.f32.gmra.mxu0 %v445
  %v608 = vpop.f32.mrf.mxu0
  %v609 = vadd.f32 0.0, %v608
  %610 = vmatmul.f32.gmra.mxu0 %v448
  %v611 = vpop.f32.mrf.mxu0
  %v612 = vadd.f32 0.0, %v611
  %613 = vmatmul.f32.gmra.mxu0 %v451
  %v614 = vpop.f32.mrf.mxu0
  %v615 = vadd.f32 0.0, %v614
  %616 = vmatmul.f32.gmra.mxu0 %v454
  %v617 = vpop.f32.mrf.mxu0
  %v618 = vadd.f32 0.0, %v617
  %619 = vmatmul.f32.gmra.mxu0 %v457
  %v620 = vpop.f32.mrf.mxu0
  %v621 = vadd.f32 0.0, %v620
  %622 = vmatmul.f32.gmra.mxu0 %v460
  %v623 = vpop.f32.mrf.mxu0
  %v624 = vadd.f32 0.0, %v623
  %625 = vmatmul.f32.gmra.mxu0 %v463
  %v626 = vpop.f32.mrf.mxu0
  %v627 = vadd.f32 0.0, %v626
  %628 = vmatmul.f32.gmra.mxu0 %v466
  %v629 = vpop.f32.mrf.mxu0
  %v630 = vadd.f32 0.0, %v629
  %631 = vmatmul.f32.gmra.mxu0 %v469
  %v632 = vpop.f32.mrf.mxu0
  %v633 = vadd.f32 0.0, %v632
  %634 = vmatmul.f32.gmra.mxu0 %v472
  %v635 = vpop.f32.mrf.mxu0
  %v636 = vadd.f32 0.0, %v635
  %637 = vmatmul.f32.gmra.mxu0 %v475
  %v638 = vpop.f32.mrf.mxu0
  %v639 = vadd.f32 0.0, %v638
  %640 = vmatmul.f32.gmra.mxu0 %v478
  %v641 = vpop.f32.mrf.mxu0
  %v642 = vadd.f32 0.0, %v641
  %643 = vmatmul.f32.gmra.mxu0 %v481
  %v644 = vpop.f32.mrf.mxu0
  %v645 = vadd.f32 0.0, %v644
  %646 = vmatmul.f32.gmra.mxu0 %v484
  %v647 = vpop.f32.mrf.mxu0
  %v648 = vadd.f32 0.0, %v647
  %649 = vmatmul.f32.gmra.mxu0 %v487
  %v650 = vpop.f32.mrf.mxu0
  %v651 = vadd.f32 0.0, %v650
  %652 = vmatmul.f32.gmra.mxu0 %v490
  %v653 = vpop.f32.mrf.mxu0
  %v654 = vadd.f32 0.0, %v653
  %655 = vmatmul.f32.gmra.mxu0 %v493
  %v656 = vpop.f32.mrf.mxu0
  %v657 = vadd.f32 0.0, %v656
  %658 = vmatmul.f32.gmra.mxu0 %v496
  %v659 = vpop.f32.mrf.mxu0
  %v660 = vadd.f32 0.0, %v659
  %661 = vmatmul.f32.gmra.mxu0 %v499
  %v662 = vpop.f32.mrf.mxu0
  %v663 = vadd.f32 0.0, %v662
  %664 = vmatmul.f32.gmra.mxu0 %v502
  %v665 = vpop.f32.mrf.mxu0
  %v666 = vadd.f32 0.0, %v665
  %667 = vmatmul.f32.gmra.mxu0 %v505
  %v668 = vpop.f32.mrf.mxu0
  %v669 = vadd.f32 0.0, %v668
  %670 = vmatmul.f32.gmra.mxu0 %v508
  %v671 = vpop.f32.mrf.mxu0
  %v672 = vadd.f32 0.0, %v671
  %673 = vmatmul.f32.gmra.mxu0 %v511
  %v674 = vpop.f32.mrf.mxu0
  %v675 = vadd.f32 0.0, %v674
  %676 = vmatmul.f32.gmra.mxu0 %v514
  %v677 = vpop.f32.mrf.mxu0
  %v678 = vadd.f32 0.0, %v677
  %679 = vmatmul.f32.gmra.mxu0 %v517
  %v680 = vpop.f32.mrf.mxu0
  %v681 = vadd.f32 0.0, %v680
  %682 = vmatmul.f32.gmra.mxu0 %v520
  %v683 = vpop.f32.mrf.mxu0
  %v684 = vadd.f32 0.0, %v683
  %685 = vmatmul.f32.gmra.mxu0 %v523
  %v686 = vpop.f32.mrf.mxu0
  %v687 = vadd.f32 0.0, %v686
  %688 = vmatmul.f32.gmra.mxu0 %v526
  %v689 = vpop.f32.mrf.mxu0
  %v690 = vadd.f32 0.0, %v689
  %691 = vmatmul.f32.gmra.mxu0 %v529
  %v692 = vpop.f32.mrf.mxu0
  %v693 = vadd.f32 0.0, %v692
  %694 = vmatmul.f32.gmra.mxu0 %v532
  %v695 = vpop.f32.mrf.mxu0
  %v696 = vadd.f32 0.0, %v695
  %697 = vmatmul.f32.gmra.mxu0 %v535
  %v698 = vpop.f32.mrf.mxu0
  %v699 = vadd.f32 0.0, %v698
  %700 = vmatmul.f32.gmra.mxu0 %v538
  %v701 = vpop.f32.mrf.mxu0
  %v702 = vadd.f32 0.0, %v701
  %703 = vmatmul.f32.gmra.mxu0 %v541
  %v704 = vpop.f32.mrf.mxu0
  %v705 = vadd.f32 0.0, %v704
  %706 = vmatmul.f32.gmra.mxu0 %v544
  %v707 = vpop.f32.mrf.mxu0
  %v708 = vadd.f32 0.0, %v707
  %709 = vmatmul.f32.gmra.mxu0 %v547
  %v710 = vpop.f32.mrf.mxu0
  %v711 = vadd.f32 0.0, %v710
  %712 = vmatmul.f32.gmra.mxu0 %v550
  %v713 = vpop.f32.mrf.mxu0
  %v714 = vadd.f32 0.0, %v713
  %715 = vmatmul.f32.gmra.mxu0 %v553
  %v716 = vpop.f32.mrf.mxu0
  %v717 = vadd.f32 0.0, %v716
  %718 = vmatmul.f32.gmra.mxu0 %v556
  %v719 = vpop.f32.mrf.mxu0
  %v720 = vadd.f32 0.0, %v719
  %721 = vmatmul.f32.gmra.mxu0 %v559
  %v722 = vpop.f32.mrf.mxu0
  %v723 = vadd.f32 0.0, %v722
  %724 = vmatmul.f32.gmra.mxu0 %v562
  %v725 = vpop.f32.mrf.mxu0
  %v726 = vadd.f32 0.0, %v725
  %727 = vmatmul.f32.gmra.mxu0 %v565
  %v728 = vpop.f32.mrf.mxu0
  %v729 = vadd.f32 0.0, %v728
  %730 = vmatmul.f32.gmra.mxu0 %v568
  %v731 = vpop.f32.mrf.mxu0
  %v732 = vadd.f32 0.0, %v731
  %733 = vmatmul.f32.gmra.mxu0 %v571
  %v734 = vpop.f32.mrf.mxu0
  %v735 = vadd.f32 0.0, %v734
  %736 = vmatmul.f32.gmra.mxu0 %v574
  %v737 = vpop.f32.mrf.mxu0
  %v738 = vadd.f32 0.0, %v737
  %739 = vmatmul.f32.gmra.mxu0 %v577
  %v740 = vpop.f32.mrf.mxu0
  %v741 = vadd.f32 0.0, %v740
  %742 = vmatmul.f32.gmra.mxu0 %v580
  %v743 = vpop.f32.mrf.mxu0
  %v744 = vadd.f32 0.0, %v743
  %745 = vmatmul.f32.gmra.mxu0 %v583
  %v746 = vpop.f32.mrf.mxu0
  %v747 = vadd.f32 0.0, %v746
  %748 = vmatmul.f32.gmra.mxu0 %v586
  %v749 = vpop.f32.mrf.mxu0
  %v750 = vadd.f32 0.0, %v749
  %751 = vdwg.mxu0
  %v752 = vmax.f32 %v246, %v606
  %v753 = vmax.f32 %v249, %v609
  %v754 = vmax.f32 %v252, %v612
  %v755 = vmax.f32 %v255, %v615
  %v756 = vmax.f32 %v258, %v618
  %v757 = vmax.f32 %v261, %v621
  %v758 = vmax.f32 %v264, %v624
  %v759 = vmax.f32 %v267, %v627
  %v760 = vmax.f32 %v270, %v630
  %v761 = vmax.f32 %v273, %v633
  %v762 = vmax.f32 %v276, %v636
  %v763 = vmax.f32 %v279, %v639
  %v764 = vmax.f32 %v282, %v642
  %v765 = vmax.f32 %v285, %v645
  %v766 = vmax.f32 %v288, %v648
  %v767 = vmax.f32 %v291, %v651
  %v768 = vmax.f32 %v294, %v654
  %v769 = vmax.f32 %v297, %v657
  %v770 = vmax.f32 %v300, %v660
  %v771 = vmax.f32 %v303, %v663
  %v772 = vmax.f32 %v306, %v666
  %v773 = vmax.f32 %v309, %v669
  %v774 = vmax.f32 %v312, %v672
  %v775 = vmax.f32 %v315, %v675
  %v776 = vmax.f32 %v318, %v678
  %v777 = vmax.f32 %v321, %v681
  %v778 = vmax.f32 %v324, %v684
  %v779 = vmax.f32 %v327, %v687
  %v780 = vmax.f32 %v330, %v690
  %v781 = vmax.f32 %v333, %v693
  %v782 = vmax.f32 %v336, %v696
  %v783 = vmax.f32 %v339, %v699
  %v784 = vmax.f32 %v342, %v702
  %v785 = vmax.f32 %v345, %v705
  %v786 = vmax.f32 %v348, %v708
  %v787 = vmax.f32 %v351, %v711
  %v788 = vmax.f32 %v354, %v714
  %v789 = vmax.f32 %v357, %v717
  %v790 = vmax.f32 %v360, %v720
  %v791 = vmax.f32 %v363, %v723
  %v792 = vmax.f32 %v366, %v726
  %v793 = vmax.f32 %v369, %v729
  %v794 = vmax.f32 %v372, %v732
  %v795 = vmax.f32 %v375, %v735
  %v796 = vmax.f32 %v378, %v738
  %v797 = vmax.f32 %v381, %v741
  %v798 = vmax.f32 %v384, %v744
  %v799 = vmax.f32 %v387, %v747
  %v800 = vmax.f32 %v390, %v750
  %v801 = vld [vmem:[%s2] sm:$0xff]
  %v802 = vld [vmem:[%s2 + $0x8] sm:$0xff]
  %v803 = vld [vmem:[%s2 + $0x10] sm:$0xff]
  %v804 = vld [vmem:[%s2 + $0x18] sm:$0xff]
  %v805 = vld [vmem:[%s2 + $0x20] sm:$0xff]
  %v806 = vld [vmem:[%s2 + $0x28] sm:$0xff]
  %v807 = vld [vmem:[%s2 + $0x30] sm:$0xff]
  %v808 = vld [vmem:[%s2 + $0x38] sm:$0xff]
  %v809 = vld [vmem:[%s2 + $0x40] sm:$0xff]
  %v810 = vld [vmem:[%s2 + $0x48] sm:$0xff]
  %v811 = vld [vmem:[%s2 + $0x50] sm:$0xff]
  %v812 = vld [vmem:[%s2 + $0x58] sm:$0xff]
  %v813 = vld [vmem:[%s2 + $0x60] sm:$0xff]
  %v814 = vld [vmem:[%s2 + $0x68] sm:$0xff]
  %v815 = vld [vmem:[%s2 + $0x70] sm:$0xff]
  %v816 = vld [vmem:[%s2 + $0x78] sm:$0xff]
  %v817 = vld [vmem:[%s2 + $0x80] sm:$0xff]
  %v818 = vld [vmem:[%s2 + $0x88] sm:$0xff]
  %v819 = vld [vmem:[%s2 + $0x90] sm:$0xff]
  %v820 = vld [vmem:[%s2 + $0x98] sm:$0xff]
  %v821 = vld [vmem:[%s2 + $0xa0] sm:$0xff]
  %v822 = vld [vmem:[%s2 + $0xa8] sm:$0xff]
  %v823 = vld [vmem:[%s2 + $0xb0] sm:$0xff]
  %v824 = vld [vmem:[%s2 + $0xb8] sm:$0xff]
  %v825 = vld [vmem:[%s2 + $0xc0] sm:$0xff]
  %v826 = vld [vmem:[%s2 + $0xc8] sm:$0xff]
  %v827 = vld [vmem:[%s2 + $0xd0] sm:$0xff]
  %v828 = vld [vmem:[%s2 + $0xd8] sm:$0xff]
  %v829 = vld [vmem:[%s2 + $0xe0] sm:$0xff]
  %v830 = vld [vmem:[%s2 + $0xe8] sm:$0xff]
  %v831 = vld [vmem:[%s2 + $0xf0] sm:$0xff]
  %v832 = vld [vmem:[%s2 + $0xf8] sm:$0xff]
  %v833 = vld [vmem:[%s2 + $0x100] sm:$0xff]
  %v834 = vld [vmem:[%s2 + $0x108] sm:$0xff]
  %v835 = vld [vmem:[%s2 + $0x110] sm:$0xff]
  %v836 = vld [vmem:[%s2 + $0x118] sm:$0xff]
  %v837 = vld [vmem:[%s2 + $0x120] sm:$0xff]
  %v838 = vld [vmem:[%s2 + $0x128] sm:$0xff]
  %v839 = vld [vmem:[%s2 + $0x130] sm:$0xff]
  %v840 = vld [vmem:[%s2 + $0x138] sm:$0xff]
  %v841 = vld [vmem:[%s2 + $0x140] sm:$0xff]
  %v842 = vld [vmem:[%s2 + $0x148] sm:$0xff]
  %v843 = vld [vmem:[%s2 + $0x150] sm:$0xff]
  %v844 = vld [vmem:[%s2 + $0x158] sm:$0xff]
  %v845 = vld [vmem:[%s2 + $0x160] sm:$0xff]
  %v846 = vld [vmem:[%s2 + $0x168] sm:$0xff]
  %v847 = vld [vmem:[%s2 + $0x170] sm:$0xff]
  %v848 = vld [vmem:[%s2 + $0x178] sm:$0xff]
  %v849 = vld [vmem:[%s2 + $0x180] sm:$0xff]
  %v851 = vsel %vm76, %v801, 0
  %v854 = vsel %vm76, %v802, 0
  %v857 = vsel %vm76, %v803, 0
  %v860 = vsel %vm76, %v804, 0
  %v863 = vsel %vm76, %v805, 0
  %v866 = vsel %vm76, %v806, 0
  %v869 = vsel %vm76, %v807, 0
  %v872 = vsel %vm76, %v808, 0
  %v875 = vsel %vm76, %v809, 0
  %v878 = vsel %vm76, %v810, 0
  %v881 = vsel %vm76, %v811, 0
  %v884 = vsel %vm76, %v812, 0
  %v887 = vsel %vm76, %v813, 0
  %v890 = vsel %vm76, %v814, 0
  %v893 = vsel %vm76, %v815, 0
  %v896 = vsel %vm76, %v816, 0
  %v899 = vsel %vm76, %v817, 0
  %v902 = vsel %vm76, %v818, 0
  %v905 = vsel %vm76, %v819, 0
  %v908 = vsel %vm76, %v820, 0
  %v911 = vsel %vm76, %v821, 0
  %v914 = vsel %vm76, %v822, 0
  %v917 = vsel %vm76, %v823, 0
  %v920 = vsel %vm76, %v824, 0
  %v923 = vsel %vm76, %v825, 0
  %v926 = vsel %vm76, %v826, 0
  %v929 = vsel %vm76, %v827, 0
  %v932 = vsel %vm76, %v828, 0
  %v935 = vsel %vm76, %v829, 0
  %v938 = vsel %vm76, %v830, 0
  %v941 = vsel %vm76, %v831, 0
  %v944 = vsel %vm76, %v832, 0
  %v947 = vsel %vm76, %v833, 0
  %v950 = vsel %vm76, %v834, 0
  %v953 = vsel %vm76, %v835, 0
  %v956 = vsel %vm76, %v836, 0
  %v959 = vsel %vm76, %v837, 0
  %v962 = vsel %vm76, %v838, 0
  %v965 = vsel %vm76, %v839, 0
  %v968 = vsel %vm76, %v840, 0
  %v971 = vsel %vm76, %v841, 0
  %v974 = vsel %vm76, %v842, 0
  %v977 = vsel %vm76, %v843, 0
  %v980 = vsel %vm76, %v844, 0
  %v983 = vsel %vm76, %v845, 0
  %v986 = vsel %vm76, %v846, 0
  %v989 = vsel %vm76, %v847, 0
  %v992 = vsel %vm76, %v848, 0
  %v995 = vsel %vm76, %v849, 0
  %997 = vmatpush.msra.mxu0 0.0
  %998 = vmatpush.msra.mxu0 0.0
  %999 = vmatpush.msra.mxu0 0.0
  %1000 = vmatpush.msra.mxu0 0.0
  %1001 = vmatpush.msra.mxu0 0.0
  %1002 = vmatpush.msra.mxu0 0.0
  %1003 = vmatpush.msra.mxu0 0.0
  %1004 = vmatpush.msra.mxu0 0.0
  %1005 = vmatpush.msra.mxu0 0.0
  %1006 = vmatpush.msra.mxu0 0.0
  %1007 = vmatpush.msra.mxu0 0.0
  %1008 = vmatpush.msra.mxu0 0.0
  %1009 = vmatpush.msra.mxu0 %v226
  %1010 = vmatpush.msra.mxu0 %v25
  %1011 = vmatpush.msra.mxu0 %v24
  %1012 = vmatpush.msra.mxu0 %v23
  %1013 = vmatmul.f32.gmra.mxu0 %v851
  %v1014 = vpop.f32.mrf.mxu0
  %v1015 = vadd.f32 0.0, %v1014
  %1016 = vmatmul.f32.gmra.mxu0 %v854
  %v1017 = vpop.f32.mrf.mxu0
  %v1018 = vadd.f32 0.0, %v1017
  %1019 = vmatmul.f32.gmra.mxu0 %v857
  %v1020 = vpop.f32.mrf.mxu0
  %v1021 = vadd.f32 0.0, %v1020
  %1022 = vmatmul.f32.gmra.mxu0 %v860
  %v1023 = vpop.f32.mrf.mxu0
  %v1024 = vadd.f32 0.0, %v1023
  %1025 = vmatmul.f32.gmra.mxu0 %v863
  %v1026 = vpop.f32.mrf.mxu0
  %v1027 = vadd.f32 0.0, %v1026
  %1028 = vmatmul.f32.gmra.mxu0 %v866
  %v1029 = vpop.f32.mrf.mxu0
  %v1030 = vadd.f32 0.0, %v1029
  %1031 = vmatmul.f32.gmra.mxu0 %v869
  %v1032 = vpop.f32.mrf.mxu0
  %v1033 = vadd.f32 0.0, %v1032
  %1034 = vmatmul.f32.gmra.mxu0 %v872
  %v1035 = vpop.f32.mrf.mxu0
  %v1036 = vadd.f32 0.0, %v1035
  %1037 = vmatmul.f32.gmra.mxu0 %v875
  %v1038 = vpop.f32.mrf.mxu0
  %v1039 = vadd.f32 0.0, %v1038
  %1040 = vmatmul.f32.gmra.mxu0 %v878
  %v1041 = vpop.f32.mrf.mxu0
  %v1042 = vadd.f32 0.0, %v1041
  %1043 = vmatmul.f32.gmra.mxu0 %v881
  %v1044 = vpop.f32.mrf.mxu0
  %v1045 = vadd.f32 0.0, %v1044
  %1046 = vmatmul.f32.gmra.mxu0 %v884
  %v1047 = vpop.f32.mrf.mxu0
  %v1048 = vadd.f32 0.0, %v1047
  %1049 = vmatmul.f32.gmra.mxu0 %v887
  %v1050 = vpop.f32.mrf.mxu0
  %v1051 = vadd.f32 0.0, %v1050
  %1052 = vmatmul.f32.gmra.mxu0 %v890
  %v1053 = vpop.f32.mrf.mxu0
  %v1054 = vadd.f32 0.0, %v1053
  %1055 = vmatmul.f32.gmra.mxu0 %v893
  %v1056 = vpop.f32.mrf.mxu0
  %v1057 = vadd.f32 0.0, %v1056
  %1058 = vmatmul.f32.gmra.mxu0 %v896
  %v1059 = vpop.f32.mrf.mxu0
  %v1060 = vadd.f32 0.0, %v1059
  %1061 = vmatmul.f32.gmra.mxu0 %v899
  %v1062 = vpop.f32.mrf.mxu0
  %v1063 = vadd.f32 0.0, %v1062
  %1064 = vmatmul.f32.gmra.mxu0 %v902
  %v1065 = vpop.f32.mrf.mxu0
  %v1066 = vadd.f32 0.0, %v1065
  %1067 = vmatmul.f32.gmra.mxu0 %v905
  %v1068 = vpop.f32.mrf.mxu0
  %v1069 = vadd.f32 0.0, %v1068
  %1070 = vmatmul.f32.gmra.mxu0 %v908
  %v1071 = vpop.f32.mrf.mxu0
  %v1072 = vadd.f32 0.0, %v1071
  %1073 = vmatmul.f32.gmra.mxu0 %v911
  %v1074 = vpop.f32.mrf.mxu0
  %v1075 = vadd.f32 0.0, %v1074
  %1076 = vmatmul.f32.gmra.mxu0 %v914
  %v1077 = vpop.f32.mrf.mxu0
  %v1078 = vadd.f32 0.0, %v1077
  %1079 = vmatmul.f32.gmra.mxu0 %v917
  %v1080 = vpop.f32.mrf.mxu0
  %v1081 = vadd.f32 0.0, %v1080
  %1082 = vmatmul.f32.gmra.mxu0 %v920
  %v1083 = vpop.f32.mrf.mxu0
  %v1084 = vadd.f32 0.0, %v1083
  %1085 = vmatmul.f32.gmra.mxu0 %v923
  %v1086 = vpop.f32.mrf.mxu0
  %v1087 = vadd.f32 0.0, %v1086
  %1088 = vmatmul.f32.gmra.mxu0 %v926
  %v1089 = vpop.f32.mrf.mxu0
  %v1090 = vadd.f32 0.0, %v1089
  %1091 = vmatmul.f32.gmra.mxu0 %v929
  %v1092 = vpop.f32.mrf.mxu0
  %v1093 = vadd.f32 0.0, %v1092
  %1094 = vmatmul.f32.gmra.mxu0 %v932
  %v1095 = vpop.f32.mrf.mxu0
  %v1096 = vadd.f32 0.0, %v1095
  %1097 = vmatmul.f32.gmra.mxu0 %v935
  %v1098 = vpop.f32.mrf.mxu0
  %v1099 = vadd.f32 0.0, %v1098
  %1100 = vmatmul.f32.gmra.mxu0 %v938
  %v1101 = vpop.f32.mrf.mxu0
  %v1102 = vadd.f32 0.0, %v1101
  %1103 = vmatmul.f32.gmra.mxu0 %v941
  %v1104 = vpop.f32.mrf.mxu0
  %v1105 = vadd.f32 0.0, %v1104
  %1106 = vmatmul.f32.gmra.mxu0 %v944
  %v1107 = vpop.f32.mrf.mxu0
  %v1108 = vadd.f32 0.0, %v1107
  %1109 = vmatmul.f32.gmra.mxu0 %v947
  %v1110 = vpop.f32.mrf.mxu0
  %v1111 = vadd.f32 0.0, %v1110
  %1112 = vmatmul.f32.gmra.mxu0 %v950
  %v1113 = vpop.f32.mrf.mxu0
  %v1114 = vadd.f32 0.0, %v1113
  %1115 = vmatmul.f32.gmra.mxu0 %v953
  %v1116 = vpop.f32.mrf.mxu0
  %v1117 = vadd.f32 0.0, %v1116
  %1118 = vmatmul.f32.gmra.mxu0 %v956
  %v1119 = vpop.f32.mrf.mxu0
  %v1120 = vadd.f32 0.0, %v1119
  %1121 = vmatmul.f32.gmra.mxu0 %v959
  %v1122 = vpop.f32.mrf.mxu0
  %v1123 = vadd.f32 0.0, %v1122
  %1124 = vmatmul.f32.gmra.mxu0 %v962
  %v1125 = vpop.f32.mrf.mxu0
  %v1126 = vadd.f32 0.0, %v1125
  %1127 = vmatmul.f32.gmra.mxu0 %v965
  %v1128 = vpop.f32.mrf.mxu0
  %v1129 = vadd.f32 0.0, %v1128
  %1130 = vmatmul.f32.gmra.mxu0 %v968
  %v1131 = vpop.f32.mrf.mxu0
  %v1132 = vadd.f32 0.0, %v1131
  %1133 = vmatmul.f32.gmra.mxu0 %v971
  %v1134 = vpop.f32.mrf.mxu0
  %v1135 = vadd.f32 0.0, %v1134
  %1136 = vmatmul.f32.gmra.mxu0 %v974
  %v1137 = vpop.f32.mrf.mxu0
  %v1138 = vadd.f32 0.0, %v1137
  %1139 = vmatmul.f32.gmra.mxu0 %v977
  %v1140 = vpop.f32.mrf.mxu0
  %v1141 = vadd.f32 0.0, %v1140
  %1142 = vmatmul.f32.gmra.mxu0 %v980
  %v1143 = vpop.f32.mrf.mxu0
  %v1144 = vadd.f32 0.0, %v1143
  %1145 = vmatmul.f32.gmra.mxu0 %v983
  %v1146 = vpop.f32.mrf.mxu0
  %v1147 = vadd.f32 0.0, %v1146
  %1148 = vmatmul.f32.gmra.mxu0 %v986
  %v1149 = vpop.f32.mrf.mxu0
  %v1150 = vadd.f32 0.0, %v1149
  %1151 = vmatmul.f32.gmra.mxu0 %v989
  %v1152 = vpop.f32.mrf.mxu0
  %v1153 = vadd.f32 0.0, %v1152
  %1154 = vmatmul.f32.gmra.mxu0 %v992
  %v1155 = vpop.f32.mrf.mxu0
  %v1156 = vadd.f32 0.0, %v1155
  %1157 = vmatmul.f32.gmra.mxu0 %v995
  %v1158 = vpop.f32.mrf.mxu0
  %v1159 = vadd.f32 0.0, %v1158
  %1160 = vdwg.mxu0
  %v1161 = vmax.f32 %v752, %v1015
  %v1162 = vmax.f32 %v753, %v1018
  %v1163 = vmax.f32 %v754, %v1021
  %v1164 = vmax.f32 %v755, %v1024
  %v1165 = vmax.f32 %v756, %v1027
  %v1166 = vmax.f32 %v757, %v1030
  %v1167 = vmax.f32 %v758, %v1033
  %v1168 = vmax.f32 %v759, %v1036
  %v1169 = vmax.f32 %v760, %v1039
  %v1170 = vmax.f32 %v761, %v1042
  %v1171 = vmax.f32 %v762, %v1045
  %v1172 = vmax.f32 %v763, %v1048
  %v1173 = vmax.f32 %v764, %v1051
  %v1174 = vmax.f32 %v765, %v1054
  %v1175 = vmax.f32 %v766, %v1057
  %v1176 = vmax.f32 %v767, %v1060
  %v1177 = vmax.f32 %v768, %v1063
  %v1178 = vmax.f32 %v769, %v1066
  %v1179 = vmax.f32 %v770, %v1069
  %v1180 = vmax.f32 %v771, %v1072
  %v1181 = vmax.f32 %v772, %v1075
  %v1182 = vmax.f32 %v773, %v1078
  %v1183 = vmax.f32 %v774, %v1081
  %v1184 = vmax.f32 %v775, %v1084
  %v1185 = vmax.f32 %v776, %v1087
  %v1186 = vmax.f32 %v777, %v1090
  %v1187 = vmax.f32 %v778, %v1093
  %v1188 = vmax.f32 %v779, %v1096
  %v1189 = vmax.f32 %v780, %v1099
  %v1190 = vmax.f32 %v781, %v1102
  %v1191 = vmax.f32 %v782, %v1105
  %v1192 = vmax.f32 %v783, %v1108
  %v1193 = vmax.f32 %v784, %v1111
  %v1194 = vmax.f32 %v785, %v1114
  %v1195 = vmax.f32 %v786, %v1117
  %v1196 = vmax.f32 %v787, %v1120
  %v1197 = vmax.f32 %v788, %v1123
  %v1198 = vmax.f32 %v789, %v1126
  %v1199 = vmax.f32 %v790, %v1129
  %v1200 = vmax.f32 %v791, %v1132
  %v1201 = vmax.f32 %v792, %v1135
  %v1202 = vmax.f32 %v793, %v1138
  %v1203 = vmax.f32 %v794, %v1141
  %v1204 = vmax.f32 %v795, %v1144
  %v1205 = vmax.f32 %v796, %v1147
  %v1206 = vmax.f32 %v797, %v1150
  %v1207 = vmax.f32 %v798, %v1153
  %v1208 = vmax.f32 %v799, %v1156
  %v1209 = vmax.f32 %v800, %v1159
  %v1210 = vld [vmem:[%s3] sm:$0xff]
  %v1211 = vld [vmem:[%s3 + $0x8] sm:$0xff]
  %v1212 = vld [vmem:[%s3 + $0x10] sm:$0xff]
  %v1213 = vld [vmem:[%s3 + $0x18] sm:$0xff]
  %v1214 = vld [vmem:[%s3 + $0x20] sm:$0xff]
  %v1215 = vld [vmem:[%s3 + $0x28] sm:$0xff]
  %v1216 = vld [vmem:[%s3 + $0x30] sm:$0xff]
  %v1217 = vld [vmem:[%s3 + $0x38] sm:$0xff]
  %v1218 = vld [vmem:[%s3 + $0x40] sm:$0xff]
  %v1219 = vld [vmem:[%s3 + $0x48] sm:$0xff]
  %v1220 = vld [vmem:[%s3 + $0x50] sm:$0xff]
  %v1221 = vld [vmem:[%s3 + $0x58] sm:$0xff]
  %v1222 = vld [vmem:[%s3 + $0x60] sm:$0xff]
  %v1223 = vld [vmem:[%s3 + $0x68] sm:$0xff]
  %v1224 = vld [vmem:[%s3 + $0x70] sm:$0xff]
  %v1225 = vld [vmem:[%s3 + $0x78] sm:$0xff]
  %v1226 = vld [vmem:[%s3 + $0x80] sm:$0xff]
  %v1227 = vld [vmem:[%s3 + $0x88] sm:$0xff]
  %v1228 = vld [vmem:[%s3 + $0x90] sm:$0xff]
  %v1229 = vld [vmem:[%s3 + $0x98] sm:$0xff]
  %v1230 = vld [vmem:[%s3 + $0xa0] sm:$0xff]
  %v1231 = vld [vmem:[%s3 + $0xa8] sm:$0xff]
  %v1232 = vld [vmem:[%s3 + $0xb0] sm:$0xff]
  %v1233 = vld [vmem:[%s3 + $0xb8] sm:$0xff]
  %v1234 = vld [vmem:[%s3 + $0xc0] sm:$0xff]
  %v1235 = vld [vmem:[%s3 + $0xc8] sm:$0xff]
  %v1236 = vld [vmem:[%s3 + $0xd0] sm:$0xff]
  %v1237 = vld [vmem:[%s3 + $0xd8] sm:$0xff]
  %v1238 = vld [vmem:[%s3 + $0xe0] sm:$0xff]
  %v1239 = vld [vmem:[%s3 + $0xe8] sm:$0xff]
  %v1240 = vld [vmem:[%s3 + $0xf0] sm:$0xff]
  %v1241 = vld [vmem:[%s3 + $0xf8] sm:$0xff]
  %v1242 = vld [vmem:[%s3 + $0x100] sm:$0xff]
  %v1243 = vld [vmem:[%s3 + $0x108] sm:$0xff]
  %v1244 = vld [vmem:[%s3 + $0x110] sm:$0xff]
  %v1245 = vld [vmem:[%s3 + $0x118] sm:$0xff]
  %v1246 = vld [vmem:[%s3 + $0x120] sm:$0xff]
  %v1247 = vld [vmem:[%s3 + $0x128] sm:$0xff]
  %v1248 = vld [vmem:[%s3 + $0x130] sm:$0xff]
  %v1249 = vld [vmem:[%s3 + $0x138] sm:$0xff]
  %v1250 = vld [vmem:[%s3 + $0x140] sm:$0xff]
  %v1251 = vld [vmem:[%s3 + $0x148] sm:$0xff]
  %v1252 = vld [vmem:[%s3 + $0x150] sm:$0xff]
  %v1253 = vld [vmem:[%s3 + $0x158] sm:$0xff]
  %v1254 = vld [vmem:[%s3 + $0x160] sm:$0xff]
  %v1255 = vld [vmem:[%s3 + $0x168] sm:$0xff]
  %v1256 = vld [vmem:[%s3 + $0x170] sm:$0xff]
  %v1257 = vld [vmem:[%s3 + $0x178] sm:$0xff]
  %v1258 = vld [vmem:[%s3 + $0x180] sm:$0xff]
  %v1260 = vsel %vm76, %v1210, 0
  %v1263 = vsel %vm76, %v1211, 0
  %v1266 = vsel %vm76, %v1212, 0
  %v1269 = vsel %vm76, %v1213, 0
  %v1272 = vsel %vm76, %v1214, 0
  %v1275 = vsel %vm76, %v1215, 0
  %v1278 = vsel %vm76, %v1216, 0
  %v1281 = vsel %vm76, %v1217, 0
  %v1284 = vsel %vm76, %v1218, 0
  %v1287 = vsel %vm76, %v1219, 0
  %v1290 = vsel %vm76, %v1220, 0
  %v1293 = vsel %vm76, %v1221, 0
  %v1296 = vsel %vm76, %v1222, 0
  %v1299 = vsel %vm76, %v1223, 0
  %v1302 = vsel %vm76, %v1224, 0
  %v1305 = vsel %vm76, %v1225, 0
  %v1308 = vsel %vm76, %v1226, 0
  %v1311 = vsel %vm76, %v1227, 0
  %v1314 = vsel %vm76, %v1228, 0
  %v1317 = vsel %vm76, %v1229, 0
  %v1320 = vsel %vm76, %v1230, 0
  %v1323 = vsel %vm76, %v1231, 0
  %v1326 = vsel %vm76, %v1232, 0
  %v1329 = vsel %vm76, %v1233, 0
  %v1332 = vsel %vm76, %v1234, 0
  %v1335 = vsel %vm76, %v1235, 0
  %v1338 = vsel %vm76, %v1236, 0
  %v1341 = vsel %vm76, %v1237, 0
  %v1344 = vsel %vm76, %v1238, 0
  %v1347 = vsel %vm76, %v1239, 0
  %v1350 = vsel %vm76, %v1240, 0
  %v1353 = vsel %vm76, %v1241, 0
  %v1356 = vsel %vm76, %v1242, 0
  %v1359 = vsel %vm76, %v1243, 0
  %v1362 = vsel %vm76, %v1244, 0
  %v1365 = vsel %vm76, %v1245, 0
  %v1368 = vsel %vm76, %v1246, 0
  %v1371 = vsel %vm76, %v1247, 0
  %v1374 = vsel %vm76, %v1248, 0
  %v1377 = vsel %vm76, %v1249, 0
  %v1380 = vsel %vm76, %v1250, 0
  %v1383 = vsel %vm76, %v1251, 0
  %v1386 = vsel %vm76, %v1252, 0
  %v1389 = vsel %vm76, %v1253, 0
  %v1392 = vsel %vm76, %v1254, 0
  %v1395 = vsel %vm76, %v1255, 0
  %v1398 = vsel %vm76, %v1256, 0
  %v1401 = vsel %vm76, %v1257, 0
  %v1404 = vsel %vm76, %v1258, 0
  %1406 = vmatpush.msra.mxu0 0.0
  %1407 = vmatpush.msra.mxu0 0.0
  %1408 = vmatpush.msra.mxu0 0.0
  %1409 = vmatpush.msra.mxu0 0.0
  %1410 = vmatpush.msra.mxu0 0.0
  %1411 = vmatpush.msra.mxu0 0.0
  %1412 = vmatpush.msra.mxu0 0.0
  %1413 = vmatpush.msra.mxu0 0.0
  %1414 = vmatpush.msra.mxu0 0.0
  %1415 = vmatpush.msra.mxu0 0.0
  %1416 = vmatpush.msra.mxu0 0.0
  %1417 = vmatpush.msra.mxu0 0.0
  %1418 = vmatpush.msra.mxu0 %v226
  %1419 = vmatpush.msra.mxu0 %v25
  %1420 = vmatpush.msra.mxu0 %v24
  %1421 = vmatpush.msra.mxu0 %v23
  %1422 = vmatmul.f32.gmra.mxu0 %v1260
  %v1423 = vpop.f32.mrf.mxu0
  %v1424 = vadd.f32 0.0, %v1423
  %1425 = vmatmul.f32.gmra.mxu0 %v1263
  %v1426 = vpop.f32.mrf.mxu0
  %v1427 = vadd.f32 0.0, %v1426
  %1428 = vmatmul.f32.gmra.mxu0 %v1266
  %v1429 = vpop.f32.mrf.mxu0
  %v1430 = vadd.f32 0.0, %v1429
  %1431 = vmatmul.f32.gmra.mxu0 %v1269
  %v1432 = vpop.f32.mrf.mxu0
  %v1433 = vadd.f32 0.0, %v1432
  %1434 = vmatmul.f32.gmra.mxu0 %v1272
  %v1435 = vpop.f32.mrf.mxu0
  %v1436 = vadd.f32 0.0, %v1435
  %1437 = vmatmul.f32.gmra.mxu0 %v1275
  %v1438 = vpop.f32.mrf.mxu0
  %v1439 = vadd.f32 0.0, %v1438
  %1440 = vmatmul.f32.gmra.mxu0 %v1278
  %v1441 = vpop.f32.mrf.mxu0
  %v1442 = vadd.f32 0.0, %v1441
  %1443 = vmatmul.f32.gmra.mxu0 %v1281
  %v1444 = vpop.f32.mrf.mxu0
  %v1445 = vadd.f32 0.0, %v1444
  %1446 = vmatmul.f32.gmra.mxu0 %v1284
  %v1447 = vpop.f32.mrf.mxu0
  %v1448 = vadd.f32 0.0, %v1447
  %1449 = vmatmul.f32.gmra.mxu0 %v1287
  %v1450 = vpop.f32.mrf.mxu0
  %v1451 = vadd.f32 0.0, %v1450
  %1452 = vmatmul.f32.gmra.mxu0 %v1290
  %v1453 = vpop.f32.mrf.mxu0
  %v1454 = vadd.f32 0.0, %v1453
  %1455 = vmatmul.f32.gmra.mxu0 %v1293
  %v1456 = vpop.f32.mrf.mxu0
  %v1457 = vadd.f32 0.0, %v1456
  %1458 = vmatmul.f32.gmra.mxu0 %v1296
  %v1459 = vpop.f32.mrf.mxu0
  %v1460 = vadd.f32 0.0, %v1459
  %1461 = vmatmul.f32.gmra.mxu0 %v1299
  %v1462 = vpop.f32.mrf.mxu0
  %v1463 = vadd.f32 0.0, %v1462
  %1464 = vmatmul.f32.gmra.mxu0 %v1302
  %v1465 = vpop.f32.mrf.mxu0
  %v1466 = vadd.f32 0.0, %v1465
  %1467 = vmatmul.f32.gmra.mxu0 %v1305
  %v1468 = vpop.f32.mrf.mxu0
  %v1469 = vadd.f32 0.0, %v1468
  %1470 = vmatmul.f32.gmra.mxu0 %v1308
  %v1471 = vpop.f32.mrf.mxu0
  %v1472 = vadd.f32 0.0, %v1471
  %1473 = vmatmul.f32.gmra.mxu0 %v1311
  %v1474 = vpop.f32.mrf.mxu0
  %v1475 = vadd.f32 0.0, %v1474
  %1476 = vmatmul.f32.gmra.mxu0 %v1314
  %v1477 = vpop.f32.mrf.mxu0
  %v1478 = vadd.f32 0.0, %v1477
  %1479 = vmatmul.f32.gmra.mxu0 %v1317
  %v1480 = vpop.f32.mrf.mxu0
  %v1481 = vadd.f32 0.0, %v1480
  %1482 = vmatmul.f32.gmra.mxu0 %v1320
  %v1483 = vpop.f32.mrf.mxu0
  %v1484 = vadd.f32 0.0, %v1483
  %1485 = vmatmul.f32.gmra.mxu0 %v1323
  %v1486 = vpop.f32.mrf.mxu0
  %v1487 = vadd.f32 0.0, %v1486
  %1488 = vmatmul.f32.gmra.mxu0 %v1326
  %v1489 = vpop.f32.mrf.mxu0
  %v1490 = vadd.f32 0.0, %v1489
  %1491 = vmatmul.f32.gmra.mxu0 %v1329
  %v1492 = vpop.f32.mrf.mxu0
  %v1493 = vadd.f32 0.0, %v1492
  %1494 = vmatmul.f32.gmra.mxu0 %v1332
  %v1495 = vpop.f32.mrf.mxu0
  %v1496 = vadd.f32 0.0, %v1495
  %1497 = vmatmul.f32.gmra.mxu0 %v1335
  %v1498 = vpop.f32.mrf.mxu0
  %v1499 = vadd.f32 0.0, %v1498
  %1500 = vmatmul.f32.gmra.mxu0 %v1338
  %v1501 = vpop.f32.mrf.mxu0
  %v1502 = vadd.f32 0.0, %v1501
  %1503 = vmatmul.f32.gmra.mxu0 %v1341
  %v1504 = vpop.f32.mrf.mxu0
  %v1505 = vadd.f32 0.0, %v1504
  %1506 = vmatmul.f32.gmra.mxu0 %v1344
  %v1507 = vpop.f32.mrf.mxu0
  %v1508 = vadd.f32 0.0, %v1507
  %1509 = vmatmul.f32.gmra.mxu0 %v1347
  %v1510 = vpop.f32.mrf.mxu0
  %v1511 = vadd.f32 0.0, %v1510
  %1512 = vmatmul.f32.gmra.mxu0 %v1350
  %v1513 = vpop.f32.mrf.mxu0
  %v1514 = vadd.f32 0.0, %v1513
  %1515 = vmatmul.f32.gmra.mxu0 %v1353
  %v1516 = vpop.f32.mrf.mxu0
  %v1517 = vadd.f32 0.0, %v1516
  %1518 = vmatmul.f32.gmra.mxu0 %v1356
  %v1519 = vpop.f32.mrf.mxu0
  %v1520 = vadd.f32 0.0, %v1519
  %1521 = vmatmul.f32.gmra.mxu0 %v1359
  %v1522 = vpop.f32.mrf.mxu0
  %v1523 = vadd.f32 0.0, %v1522
  %1524 = vmatmul.f32.gmra.mxu0 %v1362
  %v1525 = vpop.f32.mrf.mxu0
  %v1526 = vadd.f32 0.0, %v1525
  %1527 = vmatmul.f32.gmra.mxu0 %v1365
  %v1528 = vpop.f32.mrf.mxu0
  %v1529 = vadd.f32 0.0, %v1528
  %1530 = vmatmul.f32.gmra.mxu0 %v1368
  %v1531 = vpop.f32.mrf.mxu0
  %v1532 = vadd.f32 0.0, %v1531
  %1533 = vmatmul.f32.gmra.mxu0 %v1371
  %v1534 = vpop.f32.mrf.mxu0
  %v1535 = vadd.f32 0.0, %v1534
  %1536 = vmatmul.f32.gmra.mxu0 %v1374
  %v1537 = vpop.f32.mrf.mxu0
  %v1538 = vadd.f32 0.0, %v1537
  %1539 = vmatmul.f32.gmra.mxu0 %v1377
  %v1540 = vpop.f32.mrf.mxu0
  %v1541 = vadd.f32 0.0, %v1540
  %1542 = vmatmul.f32.gmra.mxu0 %v1380
  %v1543 = vpop.f32.mrf.mxu0
  %v1544 = vadd.f32 0.0, %v1543
  %1545 = vmatmul.f32.gmra.mxu0 %v1383
  %v1546 = vpop.f32.mrf.mxu0
  %v1547 = vadd.f32 0.0, %v1546
  %1548 = vmatmul.f32.gmra.mxu0 %v1386
  %v1549 = vpop.f32.mrf.mxu0
  %v1550 = vadd.f32 0.0, %v1549
  %1551 = vmatmul.f32.gmra.mxu0 %v1389
  %v1552 = vpop.f32.mrf.mxu0
  %v1553 = vadd.f32 0.0, %v1552
  %1554 = vmatmul.f32.gmra.mxu0 %v1392
  %v1555 = vpop.f32.mrf.mxu0
  %v1556 = vadd.f32 0.0, %v1555
  %1557 = vmatmul.f32.gmra.mxu0 %v1395
  %v1558 = vpop.f32.mrf.mxu0
  %v1559 = vadd.f32 0.0, %v1558
  %1560 = vmatmul.f32.gmra.mxu0 %v1398
  %v1561 = vpop.f32.mrf.mxu0
  %v1562 = vadd.f32 0.0, %v1561
  %1563 = vmatmul.f32.gmra.mxu0 %v1401
  %v1564 = vpop.f32.mrf.mxu0
  %v1565 = vadd.f32 0.0, %v1564
  %1566 = vmatmul.f32.gmra.mxu0 %v1404
  %v1567 = vpop.f32.mrf.mxu0
  %v1568 = vadd.f32 0.0, %v1567
  %1569 = vdwg.mxu0
  %v1570 = vmax.f32 %v1161, %v1424
  %v1571 = vmax.f32 %v1162, %v1427
  %v1572 = vmax.f32 %v1163, %v1430
  %v1573 = vmax.f32 %v1164, %v1433
  %v1574 = vmax.f32 %v1165, %v1436
  %v1575 = vmax.f32 %v1166, %v1439
  %v1576 = vmax.f32 %v1167, %v1442
  %v1577 = vmax.f32 %v1168, %v1445
  %v1578 = vmax.f32 %v1169, %v1448
  %v1579 = vmax.f32 %v1170, %v1451
  %v1580 = vmax.f32 %v1171, %v1454
  %v1581 = vmax.f32 %v1172, %v1457
  %v1582 = vmax.f32 %v1173, %v1460
  %v1583 = vmax.f32 %v1174, %v1463
  %v1584 = vmax.f32 %v1175, %v1466
  %v1585 = vmax.f32 %v1176, %v1469
  %v1586 = vmax.f32 %v1177, %v1472
  %v1587 = vmax.f32 %v1178, %v1475
  %v1588 = vmax.f32 %v1179, %v1478
  %v1589 = vmax.f32 %v1180, %v1481
  %v1590 = vmax.f32 %v1181, %v1484
  %v1591 = vmax.f32 %v1182, %v1487
  %v1592 = vmax.f32 %v1183, %v1490
  %v1593 = vmax.f32 %v1184, %v1493
  %v1594 = vmax.f32 %v1185, %v1496
  %v1595 = vmax.f32 %v1186, %v1499
  %v1596 = vmax.f32 %v1187, %v1502
  %v1597 = vmax.f32 %v1188, %v1505
  %v1598 = vmax.f32 %v1189, %v1508
  %v1599 = vmax.f32 %v1190, %v1511
  %v1600 = vmax.f32 %v1191, %v1514
  %v1601 = vmax.f32 %v1192, %v1517
  %v1602 = vmax.f32 %v1193, %v1520
  %v1603 = vmax.f32 %v1194, %v1523
  %v1604 = vmax.f32 %v1195, %v1526
  %v1605 = vmax.f32 %v1196, %v1529
  %v1606 = vmax.f32 %v1197, %v1532
  %v1607 = vmax.f32 %v1198, %v1535
  %v1608 = vmax.f32 %v1199, %v1538
  %v1609 = vmax.f32 %v1200, %v1541
  %v1610 = vmax.f32 %v1201, %v1544
  %v1611 = vmax.f32 %v1202, %v1547
  %v1612 = vmax.f32 %v1203, %v1550
  %v1613 = vmax.f32 %v1204, %v1553
  %v1614 = vmax.f32 %v1205, %v1556
  %v1615 = vmax.f32 %v1206, %v1559
  %v1616 = vmax.f32 %v1207, %v1562
  %v1617 = vmax.f32 %v1208, %v1565
  %v1618 = vmax.f32 %v1209, %v1568
  %v1619 = vld [vmem:[%s5] sm:$0x1]
  %v1621 = vperm.slane %v1619, 0
  %v1623 = vadd.f32 %v1570, %v1621
  %v1624 = vadd.f32 %v1571, %v1621
  %v1625 = vadd.f32 %v1572, %v1621
  %v1626 = vadd.f32 %v1573, %v1621
  %v1627 = vadd.f32 %v1574, %v1621
  %v1628 = vadd.f32 %v1575, %v1621
  %v1629 = vadd.f32 %v1576, %v1621
  %v1630 = vadd.f32 %v1577, %v1621
  %v1631 = vadd.f32 %v1578, %v1621
  %v1632 = vadd.f32 %v1579, %v1621
  %v1633 = vadd.f32 %v1580, %v1621
  %v1634 = vadd.f32 %v1581, %v1621
  %v1635 = vadd.f32 %v1582, %v1621
  %v1636 = vadd.f32 %v1583, %v1621
  %v1637 = vadd.f32 %v1584, %v1621
  %v1638 = vadd.f32 %v1585, %v1621
  %v1639 = vadd.f32 %v1586, %v1621
  %v1640 = vadd.f32 %v1587, %v1621
  %v1641 = vadd.f32 %v1588, %v1621
  %v1642 = vadd.f32 %v1589, %v1621
  %v1643 = vadd.f32 %v1590, %v1621
  %v1644 = vadd.f32 %v1591, %v1621
  %v1645 = vadd.f32 %v1592, %v1621
  %v1646 = vadd.f32 %v1593, %v1621
  %v1647 = vadd.f32 %v1594, %v1621
  %v1648 = vadd.f32 %v1595, %v1621
  %v1649 = vadd.f32 %v1596, %v1621
  %v1650 = vadd.f32 %v1597, %v1621
  %v1651 = vadd.f32 %v1598, %v1621
  %v1652 = vadd.f32 %v1599, %v1621
  %v1653 = vadd.f32 %v1600, %v1621
  %v1654 = vadd.f32 %v1601, %v1621
  %v1655 = vadd.f32 %v1602, %v1621
  %v1656 = vadd.f32 %v1603, %v1621
  %v1657 = vadd.f32 %v1604, %v1621
  %v1658 = vadd.f32 %v1605, %v1621
  %v1659 = vadd.f32 %v1606, %v1621
  %v1660 = vadd.f32 %v1607, %v1621
  %v1661 = vadd.f32 %v1608, %v1621
  %v1662 = vadd.f32 %v1609, %v1621
  %v1663 = vadd.f32 %v1610, %v1621
  %v1664 = vadd.f32 %v1611, %v1621
  %v1665 = vadd.f32 %v1612, %v1621
  %v1666 = vadd.f32 %v1613, %v1621
  %v1667 = vadd.f32 %v1614, %v1621
  %v1668 = vadd.f32 %v1615, %v1621
  %v1669 = vadd.f32 %v1616, %v1621
  %v1670 = vadd.f32 %v1617, %v1621
  %v1671 = vadd.f32 %v1618, %v1621
  %v1672 = vmax.f32 %v1623, 0.0
  %v1673 = vmax.f32 %v1624, 0.0
  %v1674 = vmax.f32 %v1625, 0.0
  %v1675 = vmax.f32 %v1626, 0.0
  %v1676 = vmax.f32 %v1627, 0.0
  %v1677 = vmax.f32 %v1628, 0.0
  %v1678 = vmax.f32 %v1629, 0.0
  %v1679 = vmax.f32 %v1630, 0.0
  %v1680 = vmax.f32 %v1631, 0.0
  %v1681 = vmax.f32 %v1632, 0.0
  %v1682 = vmax.f32 %v1633, 0.0
  %v1683 = vmax.f32 %v1634, 0.0
  %v1684 = vmax.f32 %v1635, 0.0
  %v1685 = vmax.f32 %v1636, 0.0
  %v1686 = vmax.f32 %v1637, 0.0
  %v1687 = vmax.f32 %v1638, 0.0
  %v1688 = vmax.f32 %v1639, 0.0
  %v1689 = vmax.f32 %v1640, 0.0
  %v1690 = vmax.f32 %v1641, 0.0
  %v1691 = vmax.f32 %v1642, 0.0
  %v1692 = vmax.f32 %v1643, 0.0
  %v1693 = vmax.f32 %v1644, 0.0
  %v1694 = vmax.f32 %v1645, 0.0
  %v1695 = vmax.f32 %v1646, 0.0
  %v1696 = vmax.f32 %v1647, 0.0
  %v1697 = vmax.f32 %v1648, 0.0
  %v1698 = vmax.f32 %v1649, 0.0
  %v1699 = vmax.f32 %v1650, 0.0
  %v1700 = vmax.f32 %v1651, 0.0
  %v1701 = vmax.f32 %v1652, 0.0
  %v1702 = vmax.f32 %v1653, 0.0
  %v1703 = vmax.f32 %v1654, 0.0
  %v1704 = vmax.f32 %v1655, 0.0
  %v1705 = vmax.f32 %v1656, 0.0
  %v1706 = vmax.f32 %v1657, 0.0
  %v1707 = vmax.f32 %v1658, 0.0
  %v1708 = vmax.f32 %v1659, 0.0
  %v1709 = vmax.f32 %v1660, 0.0
  %v1710 = vmax.f32 %v1661, 0.0
  %v1711 = vmax.f32 %v1662, 0.0
  %v1712 = vmax.f32 %v1663, 0.0
  %v1713 = vmax.f32 %v1664, 0.0
  %v1714 = vmax.f32 %v1665, 0.0
  %v1715 = vmax.f32 %v1666, 0.0
  %v1716 = vmax.f32 %v1667, 0.0
  %v1717 = vmax.f32 %v1668, 0.0
  %v1718 = vmax.f32 %v1669, 0.0
  %v1719 = vmax.f32 %v1670, 0.0
  %v1720 = vmax.f32 %v1671, 0.0
  %vm1721 = vcmask 48128
  %1722 = vst.msk [vmem:[%s6] sm:$0xff] %vm1721, %v1672
  %1723 = vst.msk [vmem:[%s6 + $0x8] sm:$0xff] %vm1721, %v1673
  %1724 = vst.msk [vmem:[%s6 + $0x10] sm:$0xff] %vm1721, %v1674
  %1725 = vst.msk [vmem:[%s6 + $0x18] sm:$0xff] %vm1721, %v1675
  %1726 = vst.msk [vmem:[%s6 + $0x20] sm:$0xff] %vm1721, %v1676
  %1727 = vst.msk [vmem:[%s6 + $0x28] sm:$0xff] %vm1721, %v1677
  %1728 = vst.msk [vmem:[%s6 + $0x30] sm:$0xff] %vm1721, %v1678
  %1729 = vst.msk [vmem:[%s6 + $0x38] sm:$0xff] %vm1721, %v1679
  %1730 = vst.msk [vmem:[%s6 + $0x40] sm:$0xff] %vm1721, %v1680
  %1731 = vst.msk [vmem:[%s6 + $0x48] sm:$0xff] %vm1721, %v1681
  %1732 = vst.msk [vmem:[%s6 + $0x50] sm:$0xff] %vm1721, %v1682
  %1733 = vst.msk [vmem:[%s6 + $0x58] sm:$0xff] %vm1721, %v1683
  %1734 = vst.msk [vmem:[%s6 + $0x60] sm:$0xff] %vm1721, %v1684
  %1735 = vst.msk [vmem:[%s6 + $0x68] sm:$0xff] %vm1721, %v1685
  %1736 = vst.msk [vmem:[%s6 + $0x70] sm:$0xff] %vm1721, %v1686
  %1737 = vst.msk [vmem:[%s6 + $0x78] sm:$0xff] %vm1721, %v1687
  %1738 = vst.msk [vmem:[%s6 + $0x80] sm:$0xff] %vm1721, %v1688
  %1739 = vst.msk [vmem:[%s6 + $0x88] sm:$0xff] %vm1721, %v1689
  %1740 = vst.msk [vmem:[%s6 + $0x90] sm:$0xff] %vm1721, %v1690
  %1741 = vst.msk [vmem:[%s6 + $0x98] sm:$0xff] %vm1721, %v1691
  %1742 = vst.msk [vmem:[%s6 + $0xa0] sm:$0xff] %vm1721, %v1692
  %1743 = vst.msk [vmem:[%s6 + $0xa8] sm:$0xff] %vm1721, %v1693
  %1744 = vst.msk [vmem:[%s6 + $0xb0] sm:$0xff] %vm1721, %v1694
  %1745 = vst.msk [vmem:[%s6 + $0xb8] sm:$0xff] %vm1721, %v1695
  %1746 = vst.msk [vmem:[%s6 + $0xc0] sm:$0xff] %vm1721, %v1696
  %1747 = vst.msk [vmem:[%s6 + $0xc8] sm:$0xff] %vm1721, %v1697
  %1748 = vst.msk [vmem:[%s6 + $0xd0] sm:$0xff] %vm1721, %v1698
  %1749 = vst.msk [vmem:[%s6 + $0xd8] sm:$0xff] %vm1721, %v1699
  %1750 = vst.msk [vmem:[%s6 + $0xe0] sm:$0xff] %vm1721, %v1700
  %1751 = vst.msk [vmem:[%s6 + $0xe8] sm:$0xff] %vm1721, %v1701
  %1752 = vst.msk [vmem:[%s6 + $0xf0] sm:$0xff] %vm1721, %v1702
  %1753 = vst.msk [vmem:[%s6 + $0xf8] sm:$0xff] %vm1721, %v1703
  %1754 = vst.msk [vmem:[%s6 + $0x100] sm:$0xff] %vm1721, %v1704
  %1755 = vst.msk [vmem:[%s6 + $0x108] sm:$0xff] %vm1721, %v1705
  %1756 = vst.msk [vmem:[%s6 + $0x110] sm:$0xff] %vm1721, %v1706
  %1757 = vst.msk [vmem:[%s6 + $0x118] sm:$0xff] %vm1721, %v1707
  %1758 = vst.msk [vmem:[%s6 + $0x120] sm:$0xff] %vm1721, %v1708
  %1759 = vst.msk [vmem:[%s6 + $0x128] sm:$0xff] %vm1721, %v1709
  %1760 = vst.msk [vmem:[%s6 + $0x130] sm:$0xff] %vm1721, %v1710
  %1761 = vst.msk [vmem:[%s6 + $0x138] sm:$0xff] %vm1721, %v1711
  %1762 = vst.msk [vmem:[%s6 + $0x140] sm:$0xff] %vm1721, %v1712
  %1763 = vst.msk [vmem:[%s6 + $0x148] sm:$0xff] %vm1721, %v1713
  %1764 = vst.msk [vmem:[%s6 + $0x150] sm:$0xff] %vm1721, %v1714
  %1765 = vst.msk [vmem:[%s6 + $0x158] sm:$0xff] %vm1721, %v1715
  %1766 = vst.msk [vmem:[%s6 + $0x160] sm:$0xff] %vm1721, %v1716
  %1767 = vst.msk [vmem:[%s6 + $0x168] sm:$0xff] %vm1721, %v1717
  %1768 = vst.msk [vmem:[%s6 + $0x170] sm:$0xff] %vm1721, %v1718
  %1769 = vst.msk [vmem:[%s6 + $0x178] sm:$0xff] %vm1721, %v1719
  %1770 = vst.msk [vmem:[%s6 + $0x180] sm:$0xff] %vm1721, %v1720
  // Predicated region
  $region26: #{net_forward.3} parent=0 // pred_check
    _
  $region27: #{net_forward.3} parent=0 // pred_check_branch
    %1772 = sbr.rel (0) target = $region29
  $region28: #{net_forward.3} parent=0 // pred_region
    _
  $region29: #{net_forward.3} parent=0 // pred_fallthru
    _
  // Predicated region
  $region30: #{net_forward.3} parent=0 // pred_check
    _
  $region31: #{net_forward.3} parent=0 // pred_check_branch
    %1774 = sbr.rel (0) target = $region33
  $region32: #{net_forward.3} parent=0 // pred_region
    _
  $region33: #{net_forward.3} parent=0 // pred_fallthru
    _

// kernel: net_forward.4
$region0: #{net_forward.4}
  #allocation0 [shape = 'u32[]', space=smem, size = 0x4, offset = 0x4, fixed_abs, tag = 'smem constant byte address 0x4 - core index']
  #allocation1 [shape = 'u32[72,128]{1,0:T(1,128)}', space=vmem, size = 0x9000, scoped, tag = 'internal scratch']
  %s0 = inlined_call_operand.vmem [shape: f32[56,150], index: 0, kind: input, shape index: {}]
  %s1 = inlined_call_operand.vmem [shape: f32[56,150], index: 1, kind: input, shape index: {}]
  %s2 = inlined_call_operand.vmem [shape: f32[56,150], index: 2, kind: input, shape index: {}]
  %s3 = inlined_call_operand.vmem [shape: f32[56,150], index: 3, kind: input, shape index: {}]
  %s4 = inlined_call_operand.vmem [shape: f32[150,16], index: 4, kind: input, shape index: {}]
  %s5 = inlined_call_operand.vmem [shape: f32[1,16], index: 5, kind: input, shape index: {}]
  %s6 = inlined_call_operand.vmem [shape: f32[56,16], index: 6, kind: output, shape index: {}]
  %s7 = sld [smem:[#allocation0]]
  $region34: #{net_forward.4} parent=0
    _
  %s9 = ssub.s32 1, %s7
  %s10 = scalar_select 0, %s9, %s7
  // Predicated region
  $region2: #{net_forward.4} parent=0 // pred_check
    _
  $region3: #{net_forward.4} parent=0 // pred_check_branch
    %12 = sbr.rel (0) target = $region5
  $region4: #{net_forward.4} parent=0 // pred_region
    _
  $region5: #{net_forward.4} parent=0 // pred_fallthru
    _
  // Predicated region
  $region6: #{net_forward.4} parent=0 // pred_check
    _
  $region7: #{net_forward.4} parent=0 // pred_check_branch
    %14 = sbr.rel (0) target = $region9
  $region8: #{net_forward.4} parent=0 // pred_region
    _
  $region9: #{net_forward.4} parent=0 // pred_fallthru
    _
  // Predicated region
  $region10: #{net_forward.4} parent=0 // pred_check
    _
  $region11: #{net_forward.4} parent=0 // pred_check_branch
    %16 = sbr.rel (0) target = $region13
  $region12: #{net_forward.4} parent=0 // pred_region
    _
  $region13: #{net_forward.4} parent=0 // pred_fallthru
    _
  // Predicated region
  $region14: #{net_forward.4} parent=0 // pred_check
    _
  $region15: #{net_forward.4} parent=0 // pred_check_branch
    %18 = sbr.rel (0) target = $region17
  $region16: #{net_forward.4} parent=0 // pred_region
    _
  $region17: #{net_forward.4} parent=0 // pred_fallthru
    _
  // Predicated region
  $region18: #{net_forward.4} parent=0 // pred_check
    _
  $region19: #{net_forward.4} parent=0 // pred_check_branch
    %20 = sbr.rel (0) target = $region21
  $region20: #{net_forward.4} parent=0 // pred_region
    _
  $region21: #{net_forward.4} parent=0 // pred_fallthru
    _
  // Predicated region
  $region22: #{net_forward.4} parent=0 // pred_check
    _
  $region23: #{net_forward.4} parent=0 // pred_check_branch
    %22 = sbr.rel (0) target = $region25
  $region24: #{net_forward.4} parent=0 // pred_region
    _
  $region25: #{net_forward.4} parent=0 // pred_fallthru
    _
  %v23 = vld [vmem:[%s4] sm:$0xff]
  %v24 = vld [vmem:[%s4 + $0x8] sm:$0xff]
  %v25 = vld [vmem:[%s4 + $0x10] sm:$0xff]
  %v26 = vld [vmem:[%s4 + $0x18] sm:$0xff]
  %v27 = vld [vmem:[%s4 + $0x20] sm:$0xff]
  %v28 = vld [vmem:[%s4 + $0x28] sm:$0xff]
  %v29 = vld [vmem:[%s4 + $0x30] sm:$0xff]
  %v30 = vld [vmem:[%s4 + $0x38] sm:$0xff]
  %v31 = vld [vmem:[%s4 + $0x40] sm:$0xff]
  %v32 = vld [vmem:[%s4 + $0x48] sm:$0xff]
  %v33 = vld [vmem:[%s4 + $0x50] sm:$0xff]
  %v34 = vld [vmem:[%s4 + $0x58] sm:$0xff]
  %v35 = vld [vmem:[%s4 + $0x60] sm:$0xff]
  %v36 = vld [vmem:[%s4 + $0x68] sm:$0xff]
  %v37 = vld [vmem:[%s4 + $0x70] sm:$0xff]
  %v38 = vld [vmem:[%s4 + $0x78] sm:$0xff]
  %v39 = vld [vmem:[%s4 + $0x80] sm:$0xff]
  %v40 = vld [vmem:[%s4 + $0x88] sm:$0xff]
  %v41 = vld [vmem:[%s4 + $0x90] sm:$0x3f]
  %v42 = vld [vmem:[%s0] sm:$0xff]
  %v43 = vld [vmem:[%s0 + $0x8] sm:$0xff]
  %v44 = vld [vmem:[%s0 + $0x10] sm:$0xff]
  %v45 = vld [vmem:[%s0 + $0x18] sm:$0xff]
  %v46 = vld [vmem:[%s0 + $0x20] sm:$0xff]
  %v47 = vld [vmem:[%s0 + $0x28] sm:$0xff]
  %v48 = vld [vmem:[%s0 + $0x30] sm:$0xff]
  %v49 = vld [vmem:[%s0 + $0x38] sm:$0xff]
  %v50 = vld [vmem:[%s0 + $0x40] sm:$0xff]
  %v51 = vld [vmem:[%s0 + $0x48] sm:$0xff]
  %v52 = vld [vmem:[%s0 + $0x50] sm:$0xff]
  %v53 = vld [vmem:[%s0 + $0x58] sm:$0xff]
  %v54 = vld [vmem:[%s0 + $0x60] sm:$0xff]
  %v55 = vld [vmem:[%s0 + $0x68] sm:$0xff]
  %vm56 = vcmask 179200
  %v58 = vsel %vm56, %v43, 0
  %v61 = vsel %vm56, %v45, 0
  %v64 = vsel %vm56, %v47, 0
  %v67 = vsel %vm56, %v49, 0
  %v70 = vsel %vm56, %v51, 0
  %v73 = vsel %vm56, %v53, 0
  %v76 = vsel %vm56, %v55, 0
  %vm78 = vcmask 1045504
  %v80 = vsel %vm78, %v41, 0
  %82 = vmatpush.msra.mxu0 %v38
  %83 = vmatpush.msra.mxu0 %v37
  %84 = vmatpush.msra.mxu0 %v36
  %85 = vmatpush.msra.mxu0 %v35
  %86 = vmatpush.msra.mxu0 %v34
  %87 = vmatpush.msra.mxu0 %v33
  %88 = vmatpush.msra.mxu0 %v32
  %89 = vmatpush.msra.mxu0 %v31
  %90 = vmatpush.msra.mxu0 %v30
  %91 = vmatpush.msra.mxu0 %v29
  %92 = vmatpush.msra.mxu0 %v28
  %93 = vmatpush.msra.mxu0 %v27
  %94 = vmatpush.msra.mxu0 %v26
  %95 = vmatpush.msra.mxu0 %v25
  %96 = vmatpush.msra.mxu0 %v24
  %97 = vmatpush.msra.mxu0 %v23
  %98 = vmatmul.f32.gmra.mxu0 %v42
  %v99 = vpop.f32.mrf.mxu0
  %v100 = vadd.f32 0.0, %v99
  %101 = vmatmul.f32.gmra.mxu0 %v44
  %v102 = vpop.f32.mrf.mxu0
  %v103 = vadd.f32 0.0, %v102
  %104 = vmatmul.f32.gmra.mxu0 %v46
  %v105 = vpop.f32.mrf.mxu0
  %v106 = vadd.f32 0.0, %v105
  %107 = vmatmul.f32.gmra.mxu0 %v48
  %v108 = vpop.f32.mrf.mxu0
  %v109 = vadd.f32 0.0, %v108
  %110 = vmatmul.f32.gmra.mxu0 %v50
  %v111 = vpop.f32.mrf.mxu0
  %v112 = vadd.f32 0.0, %v111
  %113 = vmatmul.f32.gmra.mxu0 %v52
  %v114 = vpop.f32.mrf.mxu0
  %v115 = vadd.f32 0.0, %v114
  %116 = vmatmul.f32.gmra.mxu0 %v54
  %v117 = vpop.f32.mrf.mxu0
  %v118 = vadd.f32 0.0, %v117
  %119 = vdwg.mxu0
  %120 = vmatpush.msra.mxu0 0.0
  %121 = vmatpush.msra.mxu0 0.0
  %122 = vmatpush.msra.mxu0 0.0
  %123 = vmatpush.msra.mxu0 0.0
  %124 = vmatpush.msra.mxu0 0.0
  %125 = vmatpush.msra.mxu0 0.0
  %126 = vmatpush.msra.mxu0 0.0
  %127 = vmatpush.msra.mxu0 0.0
  %128 = vmatpush.msra.mxu0 0.0
  %129 = vmatpush.msra.mxu0 0.0
  %130 = vmatpush.msra.mxu0 0.0
  %131 = vmatpush.msra.mxu0 0.0
  %132 = vmatpush.msra.mxu0 0.0
  %133 = vmatpush.msra.mxu0 %v80
  %134 = vmatpush.msra.mxu0 %v40
  %135 = vmatpush.msra.mxu0 %v39
  %136 = vmatmul.f32.gmra.mxu0 %v58
  %v137 = vpop.f32.mrf.mxu0
  %v138 = vadd.f32 %v100, %v137
  %139 = vmatmul.f32.gmra.mxu0 %v61
  %v140 = vpop.f32.mrf.mxu0
  %v141 = vadd.f32 %v103, %v140
  %142 = vmatmul.f32.gmra.mxu0 %v64
  %v143 = vpop.f32.mrf.mxu0
  %v144 = vadd.f32 %v106, %v143
  %145 = vmatmul.f32.gmra.mxu0 %v67
  %v146 = vpop.f32.mrf.mxu0
  %v147 = vadd.f32 %v109, %v146
  %148 = vmatmul.f32.gmra.mxu0 %v70
  %v149 = vpop.f32.mrf.mxu0
  %v150 = vadd.f32 %v112, %v149
  %151 = vmatmul.f32.gmra.mxu0 %v73
  %v152 = vpop.f32.mrf.mxu0
  %v153 = vadd.f32 %v115, %v152
  %154 = vmatmul.f32.gmra.mxu0 %v76
  %v155 = vpop.f32.mrf.mxu0
  %v156 = vadd.f32 %v118, %v155
  %157 = vdwg.mxu0
  %v158 = vld [vmem:[%s1] sm:$0xff]
  %v159 = vld [vmem:[%s1 + $0x8] sm:$0xff]
  %v160 = vld [vmem:[%s1 + $0x10] sm:$0xff]
  %v161 = vld [vmem:[%s1 + $0x18] sm:$0xff]
  %v162 = vld [vmem:[%s1 + $0x20] sm:$0xff]
  %v163 = vld [vmem:[%s1 + $0x28] sm:$0xff]
  %v164 = vld [vmem:[%s1 + $0x30] sm:$0xff]
  %v165 = vld [vmem:[%s1 + $0x38] sm:$0xff]
  %v166 = vld [vmem:[%s1 + $0x40] sm:$0xff]
  %v167 = vld [vmem:[%s1 + $0x48] sm:$0xff]
  %v168 = vld [vmem:[%s1 + $0x50] sm:$0xff]
  %v169 = vld [vmem:[%s1 + $0x58] sm:$0xff]
  %v170 = vld [vmem:[%s1 + $0x60] sm:$0xff]
  %v171 = vld [vmem:[%s1 + $0x68] sm:$0xff]
  %v173 = vsel %vm56, %v159, 0
  %v176 = vsel %vm56, %v161, 0
  %v179 = vsel %vm56, %v163, 0
  %v182 = vsel %vm56, %v165, 0
  %v185 = vsel %vm56, %v167, 0
  %v188 = vsel %vm56, %v169, 0
  %v191 = vsel %vm56, %v171, 0
  %193 = vmatpush.msra.mxu0 %v38
  %194 = vmatpush.msra.mxu0 %v37
  %195 = vmatpush.msra.mxu0 %v36
  %196 = vmatpush.msra.mxu0 %v35
  %197 = vmatpush.msra.mxu0 %v34
  %198 = vmatpush.msra.mxu0 %v33
  %199 = vmatpush.msra.mxu0 %v32
  %200 = vmatpush.msra.mxu0 %v31
  %201 = vmatpush.msra.mxu0 %v30
  %202 = vmatpush.msra.mxu0 %v29
  %203 = vmatpush.msra.mxu0 %v28
  %204 = vmatpush.msra.mxu0 %v27
  %205 = vmatpush.msra.mxu0 %v26
  %206 = vmatpush.msra.mxu0 %v25
  %207 = vmatpush.msra.mxu0 %v24
  %208 = vmatpush.msra.mxu0 %v23
  %209 = vmatmul.f32.gmra.mxu0 %v158
  %v210 = vpop.f32.mrf.mxu0
  %v211 = vadd.f32 0.0, %v210
  %212 = vmatmul.f32.gmra.mxu0 %v160
  %v213 = vpop.f32.mrf.mxu0
  %v214 = vadd.f32 0.0, %v213
  %215 = vmatmul.f32.gmra.mxu0 %v162
  %v216 = vpop.f32.mrf.mxu0
  %v217 = vadd.f32 0.0, %v216
  %218 = vmatmul.f32.gmra.mxu0 %v164
  %v219 = vpop.f32.mrf.mxu0
  %v220 = vadd.f32 0.0, %v219
  %221 = vmatmul.f32.gmra.mxu0 %v166
  %v222 = vpop.f32.mrf.mxu0
  %v223 = vadd.f32 0.0, %v222
  %224 = vmatmul.f32.gmra.mxu0 %v168
  %v225 = vpop.f32.mrf.mxu0
  %v226 = vadd.f32 0.0, %v225
  %227 = vmatmul.f32.gmra.mxu0 %v170
  %v228 = vpop.f32.mrf.mxu0
  %v229 = vadd.f32 0.0, %v228
  %230 = vdwg.mxu0
  %231 = vmatpush.msra.mxu0 0.0
  %232 = vmatpush.msra.mxu0 0.0
  %233 = vmatpush.msra.mxu0 0.0
  %234 = vmatpush.msra.mxu0 0.0
  %235 = vmatpush.msra.mxu0 0.0
  %236 = vmatpush.msra.mxu0 0.0
  %237 = vmatpush.msra.mxu0 0.0
  %238 = vmatpush.msra.mxu0 0.0
  %239 = vmatpush.msra.mxu0 0.0
  %240 = vmatpush.msra.mxu0 0.0
  %241 = vmatpush.msra.mxu0 0.0
  %242 = vmatpush.msra.mxu0 0.0
  %243 = vmatpush.msra.mxu0 0.0
  %244 = vmatpush.msra.mxu0 %v80
  %245 = vmatpush.msra.mxu0 %v40
  %246 = vmatpush.msra.mxu0 %v39
  %247 = vmatmul.f32.gmra.mxu0 %v173
  %v248 = vpop.f32.mrf.mxu0
  %v249 = vadd.f32 %v211, %v248
  %250 = vmatmul.f32.gmra.mxu0 %v176
  %v251 = vpop.f32.mrf.mxu0
  %v252 = vadd.f32 %v214, %v251
  %253 = vmatmul.f32.gmra.mxu0 %v179
  %v254 = vpop.f32.mrf.mxu0
  %v255 = vadd.f32 %v217, %v254
  %256 = vmatmul.f32.gmra.mxu0 %v182
  %v257 = vpop.f32.mrf.mxu0
  %v258 = vadd.f32 %v220, %v257
  %259 = vmatmul.f32.gmra.mxu0 %v185
  %v260 = vpop.f32.mrf.mxu0
  %v261 = vadd.f32 %v223, %v260
  %262 = vmatmul.f32.gmra.mxu0 %v188
  %v263 = vpop.f32.mrf.mxu0
  %v264 = vadd.f32 %v226, %v263
  %265 = vmatmul.f32.gmra.mxu0 %v191
  %v266 = vpop.f32.mrf.mxu0
  %v267 = vadd.f32 %v229, %v266
  %268 = vdwg.mxu0
  %v269 = vmax.f32 %v138, %v249
  %v270 = vmax.f32 %v141, %v252
  %v271 = vmax.f32 %v144, %v255
  %v272 = vmax.f32 %v147, %v258
  %v273 = vmax.f32 %v150, %v261
  %v274 = vmax.f32 %v153, %v264
  %v275 = vmax.f32 %v156, %v267
  %v276 = vld [vmem:[%s2] sm:$0xff]
  %v277 = vld [vmem:[%s2 + $0x8] sm:$0xff]
  %v278 = vld [vmem:[%s2 + $0x10] sm:$0xff]
  %v279 = vld [vmem:[%s2 + $0x18] sm:$0xff]
  %v280 = vld [vmem:[%s2 + $0x20] sm:$0xff]
  %v281 = vld [vmem:[%s2 + $0x28] sm:$0xff]
  %v282 = vld [vmem:[%s2 + $0x30] sm:$0xff]
  %v283 = vld [vmem:[%s2 + $0x38] sm:$0xff]
  %v284 = vld [vmem:[%s2 + $0x40] sm:$0xff]
  %v285 = vld [vmem:[%s2 + $0x48] sm:$0xff]
  %v286 = vld [vmem:[%s2 + $0x50] sm:$0xff]
  %v287 = vld [vmem:[%s2 + $0x58] sm:$0xff]
  %v288 = vld [vmem:[%s2 + $0x60] sm:$0xff]
  %v289 = vld [vmem:[%s2 + $0x68] sm:$0xff]
  %v291 = vsel %vm56, %v277, 0
  %v294 = vsel %vm56, %v279, 0
  %v297 = vsel %vm56, %v281, 0
  %v300 = vsel %vm56, %v283, 0
  %v303 = vsel %vm56, %v285, 0
  %v306 = vsel %vm56, %v287, 0
  %v309 = vsel %vm56, %v289, 0
  %311 = vmatpush.msra.mxu0 %v38
  %312 = vmatpush.msra.mxu0 %v37
  %313 = vmatpush.msra.mxu0 %v36
  %314 = vmatpush.msra.mxu0 %v35
  %315 = vmatpush.msra.mxu0 %v34
  %316 = vmatpush.msra.mxu0 %v33
  %317 = vmatpush.msra.mxu0 %v32
  %318 = vmatpush.msra.mxu0 %v31
  %319 = vmatpush.msra.mxu0 %v30
  %320 = vmatpush.msra.mxu0 %v29
  %321 = vmatpush.msra.mxu0 %v28
  %322 = vmatpush.msra.mxu0 %v27
  %323 = vmatpush.msra.mxu0 %v26
  %324 = vmatpush.msra.mxu0 %v25
  %325 = vmatpush.msra.mxu0 %v24
  %326 = vmatpush.msra.mxu0 %v23
  %327 = vmatmul.f32.gmra.mxu0 %v276
  %v328 = vpop.f32.mrf.mxu0
  %v329 = vadd.f32 0.0, %v328
  %330 = vmatmul.f32.gmra.mxu0 %v278
  %v331 = vpop.f32.mrf.mxu0
  %v332 = vadd.f32 0.0, %v331
  %333 = vmatmul.f32.gmra.mxu0 %v280
  %v334 = vpop.f32.mrf.mxu0
  %v335 = vadd.f32 0.0, %v334
  %336 = vmatmul.f32.gmra.mxu0 %v282
  %v337 = vpop.f32.mrf.mxu0
  %v338 = vadd.f32 0.0, %v337
  %339 = vmatmul.f32.gmra.mxu0 %v284
  %v340 = vpop.f32.mrf.mxu0
  %v341 = vadd.f32 0.0, %v340
  %342 = vmatmul.f32.gmra.mxu0 %v286
  %v343 = vpop.f32.mrf.mxu0
  %v344 = vadd.f32 0.0, %v343
  %345 = vmatmul.f32.gmra.mxu0 %v288
  %v346 = vpop.f32.mrf.mxu0
  %v347 = vadd.f32 0.0, %v346
  %348 = vdwg.mxu0
  %349 = vmatpush.msra.mxu0 0.0
  %350 = vmatpush.msra.mxu0 0.0
  %351 = vmatpush.msra.mxu0 0.0
  %352 = vmatpush.msra.mxu0 0.0
  %353 = vmatpush.msra.mxu0 0.0
  %354 = vmatpush.msra.mxu0 0.0
  %355 = vmatpush.msra.mxu0 0.0
  %356 = vmatpush.msra.mxu0 0.0
  %357 = vmatpush.msra.mxu0 0.0
  %358 = vmatpush.msra.mxu0 0.0
  %359 = vmatpush.msra.mxu0 0.0
  %360 = vmatpush.msra.mxu0 0.0
  %361 = vmatpush.msra.mxu0 0.0
  %362 = vmatpush.msra.mxu0 %v80
  %363 = vmatpush.msra.mxu0 %v40
  %364 = vmatpush.msra.mxu0 %v39
  %365 = vmatmul.f32.gmra.mxu0 %v291
  %v366 = vpop.f32.mrf.mxu0
  %v367 = vadd.f32 %v329, %v366
  %368 = vmatmul.f32.gmra.mxu0 %v294
  %v369 = vpop.f32.mrf.mxu0
  %v370 = vadd.f32 %v332, %v369
  %371 = vmatmul.f32.gmra.mxu0 %v297
  %v372 = vpop.f32.mrf.mxu0
  %v373 = vadd.f32 %v335, %v372
  %374 = vmatmul.f32.gmra.mxu0 %v300
  %v375 = vpop.f32.mrf.mxu0
  %v376 = vadd.f32 %v338, %v375
  %377 = vmatmul.f32.gmra.mxu0 %v303
  %v378 = vpop.f32.mrf.mxu0
  %v379 = vadd.f32 %v341, %v378
  %380 = vmatmul.f32.gmra.mxu0 %v306
  %v381 = vpop.f32.mrf.mxu0
  %v382 = vadd.f32 %v344, %v381
  %383 = vmatmul.f32.gmra.mxu0 %v309
  %v384 = vpop.f32.mrf.mxu0
  %v385 = vadd.f32 %v347, %v384
  %386 = vdwg.mxu0
  %v387 = vmax.f32 %v269, %v367
  %v388 = vmax.f32 %v270, %v370
  %v389 = vmax.f32 %v271, %v373
  %v390 = vmax.f32 %v272, %v376
  %v391 = vmax.f32 %v273, %v379
  %v392 = vmax.f32 %v274, %v382
  %v393 = vmax.f32 %v275, %v385
  %v394 = vld [vmem:[%s3] sm:$0xff]
  %v395 = vld [vmem:[%s3 + $0x8] sm:$0xff]
  %v396 = vld [vmem:[%s3 + $0x10] sm:$0xff]
  %v397 = vld [vmem:[%s3 + $0x18] sm:$0xff]
  %v398 = vld [vmem:[%s3 + $0x20] sm:$0xff]
  %v399 = vld [vmem:[%s3 + $0x28] sm:$0xff]
  %v400 = vld [vmem:[%s3 + $0x30] sm:$0xff]
  %v401 = vld [vmem:[%s3 + $0x38] sm:$0xff]
  %v402 = vld [vmem:[%s3 + $0x40] sm:$0xff]
  %v403 = vld [vmem:[%s3 + $0x48] sm:$0xff]
  %v404 = vld [vmem:[%s3 + $0x50] sm:$0xff]
  %v405 = vld [vmem:[%s3 + $0x58] sm:$0xff]
  %v406 = vld [vmem:[%s3 + $0x60] sm:$0xff]
  %v407 = vld [vmem:[%s3 + $0x68] sm:$0xff]
  %v409 = vsel %vm56, %v395, 0
  %v412 = vsel %vm56, %v397, 0
  %v415 = vsel %vm56, %v399, 0
  %v418 = vsel %vm56, %v401, 0
  %v421 = vsel %vm56, %v403, 0
  %v424 = vsel %vm56, %v405, 0
  %v427 = vsel %vm56, %v407, 0
  %429 = vmatpush.msra.mxu0 %v38
  %430 = vmatpush.msra.mxu0 %v37
  %431 = vmatpush.msra.mxu0 %v36
  %432 = vmatpush.msra.mxu0 %v35
  %433 = vmatpush.msra.mxu0 %v34
  %434 = vmatpush.msra.mxu0 %v33
  %435 = vmatpush.msra.mxu0 %v32
  %436 = vmatpush.msra.mxu0 %v31
  %437 = vmatpush.msra.mxu0 %v30
  %438 = vmatpush.msra.mxu0 %v29
  %439 = vmatpush.msra.mxu0 %v28
  %440 = vmatpush.msra.mxu0 %v27
  %441 = vmatpush.msra.mxu0 %v26
  %442 = vmatpush.msra.mxu0 %v25
  %443 = vmatpush.msra.mxu0 %v24
  %444 = vmatpush.msra.mxu0 %v23
  %445 = vmatmul.f32.gmra.mxu0 %v394
  %v446 = vpop.f32.mrf.mxu0
  %v447 = vadd.f32 0.0, %v446
  %448 = vmatmul.f32.gmra.mxu0 %v396
  %v449 = vpop.f32.mrf.mxu0
  %v450 = vadd.f32 0.0, %v449
  %451 = vmatmul.f32.gmra.mxu0 %v398
  %v452 = vpop.f32.mrf.mxu0
  %v453 = vadd.f32 0.0, %v452
  %454 = vmatmul.f32.gmra.mxu0 %v400
  %v455 = vpop.f32.mrf.mxu0
  %v456 = vadd.f32 0.0, %v455
  %457 = vmatmul.f32.gmra.mxu0 %v402
  %v458 = vpop.f32.mrf.mxu0
  %v459 = vadd.f32 0.0, %v458
  %460 = vmatmul.f32.gmra.mxu0 %v404
  %v461 = vpop.f32.mrf.mxu0
  %v462 = vadd.f32 0.0, %v461
  %463 = vmatmul.f32.gmra.mxu0 %v406
  %v464 = vpop.f32.mrf.mxu0
  %v465 = vadd.f32 0.0, %v464
  %466 = vdwg.mxu0
  %467 = vmatpush.msra.mxu0 0.0
  %468 = vmatpush.msra.mxu0 0.0
  %469 = vmatpush.msra.mxu0 0.0
  %470 = vmatpush.msra.mxu0 0.0
  %471 = vmatpush.msra.mxu0 0.0
  %472 = vmatpush.msra.mxu0 0.0
  %473 = vmatpush.msra.mxu0 0.0
  %474 = vmatpush.msra.mxu0 0.0
  %475 = vmatpush.msra.mxu0 0.0
  %476 = vmatpush.msra.mxu0 0.0
  %477 = vmatpush.msra.mxu0 0.0
  %478 = vmatpush.msra.mxu0 0.0
  %479 = vmatpush.msra.mxu0 0.0
  %480 = vmatpush.msra.mxu0 %v80
  %481 = vmatpush.msra.mxu0 %v40
  %482 = vmatpush.msra.mxu0 %v39
  %483 = vmatmul.f32.gmra.mxu0 %v409
  %v484 = vpop.f32.mrf.mxu0
  %v485 = vadd.f32 %v447, %v484
  %486 = vmatmul.f32.gmra.mxu0 %v412
  %v487 = vpop.f32.mrf.mxu0
  %v488 = vadd.f32 %v450, %v487
  %489 = vmatmul.f32.gmra.mxu0 %v415
  %v490 = vpop.f32.mrf.mxu0
  %v491 = vadd.f32 %v453, %v490
  %492 = vmatmul.f32.gmra.mxu0 %v418
  %v493 = vpop.f32.mrf.mxu0
  %v494 = vadd.f32 %v456, %v493
  %495 = vmatmul.f32.gmra.mxu0 %v421
  %v496 = vpop.f32.mrf.mxu0
  %v497 = vadd.f32 %v459, %v496
  %498 = vmatmul.f32.gmra.mxu0 %v424
  %v499 = vpop.f32.mrf.mxu0
  %v500 = vadd.f32 %v462, %v499
  %501 = vmatmul.f32.gmra.mxu0 %v427
  %v502 = vpop.f32.mrf.mxu0
  %v503 = vadd.f32 %v465, %v502
  %504 = vdwg.mxu0
  %v505 = vmax.f32 %v387, %v485
  %v506 = vmax.f32 %v388, %v488
  %v507 = vmax.f32 %v389, %v491
  %v508 = vmax.f32 %v390, %v494
  %v509 = vmax.f32 %v391, %v497
  %v510 = vmax.f32 %v392, %v500
  %v511 = vmax.f32 %v393, %v503
  %v512 = vld [vmem:[%s5] sm:$0x1]
  %v514 = vperm.slane %v512, 0
  %v516 = vadd.f32 %v505, %v514
  %v517 = vadd.f32 %v506, %v514
  %v518 = vadd.f32 %v507, %v514
  %v519 = vadd.f32 %v508, %v514
  %v520 = vadd.f32 %v509, %v514
  %v521 = vadd.f32 %v510, %v514
  %v522 = vadd.f32 %v511, %v514
  %v523 = vmax.f32 %v516, 0.0
  %v524 = vmax.f32 %v517, 0.0
  %v525 = vmax.f32 %v518, 0.0
  %v526 = vmax.f32 %v519, 0.0
  %v527 = vmax.f32 %v520, 0.0
  %v528 = vmax.f32 %v521, 0.0
  %v529 = vmax.f32 %v522, 0.0
  %vm530 = vcmask 130048
  %531 = vst.msk [vmem:[%s6] sm:$0xff] %vm530, %v523
  %532 = vst.msk [vmem:[%s6 + $0x8] sm:$0xff] %vm530, %v524
  %533 = vst.msk [vmem:[%s6 + $0x10] sm:$0xff] %vm530, %v525
  %534 = vst.msk [vmem:[%s6 + $0x18] sm:$0xff] %vm530, %v526
  %535 = vst.msk [vmem:[%s6 + $0x20] sm:$0xff] %vm530, %v527
  %536 = vst.msk [vmem:[%s6 + $0x28] sm:$0xff] %vm530, %v528
  %537 = vst.msk [vmem:[%s6 + $0x30] sm:$0xff] %vm530, %v529
  // Predicated region
  $region26: #{net_forward.4} parent=0 // pred_check
    _
  $region27: #{net_forward.4} parent=0 // pred_check_branch
    %539 = sbr.rel (0) target = $region29
  $region28: #{net_forward.4} parent=0 // pred_region
    _
  $region29: #{net_forward.4} parent=0 // pred_fallthru
    _
  // Predicated region
  $region30: #{net_forward.4} parent=0 // pred_check
    _
  $region31: #{net_forward.4} parent=0 // pred_check_branch
    %541 = sbr.rel (0) target = $region33
  $region32: #{net_forward.4} parent=0 // pred_region
    _
  $region33: #{net_forward.4} parent=0 // pred_fallthru
    _

// kernel: net_forward.5
$region0: #{net_forward.5}
  #allocation0 [shape = 'u32[]', space=smem, size = 0x4, offset = 0x4, fixed_abs, tag = 'smem constant byte address 0x4 - core index']
  #allocation1 [shape = 'u32[72,128]{1,0:T(1,128)}', space=vmem, size = 0x9000, scoped, tag = 'internal scratch']
  %s0 = inlined_call_operand.vmem [shape: f32[8,400], index: 0, kind: input, shape index: {}]
  %s1 = inlined_call_operand.vmem [shape: f32[400,120], index: 1, kind: input, shape index: {}]
  %s2 = inlined_call_operand.vmem [shape: f32[1,120], index: 2, kind: input, shape index: {}]
  %s3 = inlined_call_operand.vmem [shape: f32[120,84], index: 3, kind: input, shape index: {}]
  %s4 = inlined_call_operand.vmem [shape: f32[1,84], index: 4, kind: input, shape index: {}]
  %s5 = inlined_call_operand.vmem [shape: f32[84,10], index: 5, kind: input, shape index: {}]
  %s6 = inlined_call_operand.vmem [shape: f32[1,10], index: 6, kind: input, shape index: {}]
  %s7 = inlined_call_operand.vmem [shape: f32[8,10], index: 7, kind: output, shape index: {}]
  %s8 = sld [smem:[#allocation0]]
  $region38: #{net_forward.5} parent=0
    _
  %s10 = ssub.s32 1, %s8
  %s11 = scalar_select 0, %s10, %s8
  // Predicated region
  $region2: #{net_forward.5} parent=0 // pred_check
    _
  $region3: #{net_forward.5} parent=0 // pred_check_branch
    %13 = sbr.rel (0) target = $region5
  $region4: #{net_forward.5} parent=0 // pred_region
    _
  $region5: #{net_forward.5} parent=0 // pred_fallthru
    _
  // Predicated region
  $region6: #{net_forward.5} parent=0 // pred_check
    _
  $region7: #{net_forward.5} parent=0 // pred_check_branch
    %15 = sbr.rel (0) target = $region9
  $region8: #{net_forward.5} parent=0 // pred_region
    _
  $region9: #{net_forward.5} parent=0 // pred_fallthru
    _
  // Predicated region
  $region10: #{net_forward.5} parent=0 // pred_check
    _
  $region11: #{net_forward.5} parent=0 // pred_check_branch
    %17 = sbr.rel (0) target = $region13
  $region12: #{net_forward.5} parent=0 // pred_region
    _
  $region13: #{net_forward.5} parent=0 // pred_fallthru
    _
  // Predicated region
  $region14: #{net_forward.5} parent=0 // pred_check
    _
  $region15: #{net_forward.5} parent=0 // pred_check_branch
    %19 = sbr.rel (0) target = $region17
  $region16: #{net_forward.5} parent=0 // pred_region
    _
  $region17: #{net_forward.5} parent=0 // pred_fallthru
    _
  // Predicated region
  $region18: #{net_forward.5} parent=0 // pred_check
    _
  $region19: #{net_forward.5} parent=0 // pred_check_branch
    %21 = sbr.rel (0) target = $region21
  $region20: #{net_forward.5} parent=0 // pred_region
    _
  $region21: #{net_forward.5} parent=0 // pred_fallthru
    _
  // Predicated region
  $region22: #{net_forward.5} parent=0 // pred_check
    _
  $region23: #{net_forward.5} parent=0 // pred_check_branch
    %23 = sbr.rel (0) target = $region25
  $region24: #{net_forward.5} parent=0 // pred_region
    _
  $region25: #{net_forward.5} parent=0 // pred_fallthru
    _
  // Predicated region
  $region26: #{net_forward.5} parent=0 // pred_check
    _
  $region27: #{net_forward.5} parent=0 // pred_check_branch
    %25 = sbr.rel (0) target = $region29
  $region28: #{net_forward.5} parent=0 // pred_region
    _
  $region29: #{net_forward.5} parent=0 // pred_fallthru
    _
  %v26 = vld [vmem:[%s0] sm:$0xff]
  %v27 = vld [vmem:[%s0 + $0x8] sm:$0xff]
  %v28 = vld [vmem:[%s0 + $0x10] sm:$0xff]
  %v29 = vld [vmem:[%s0 + $0x18] sm:$0xff]
  %v30 = vld [vmem:[%s1] sm:$0xff]
  %v31 = vld [vmem:[%s1 + $0x8] sm:$0xff]
  %v32 = vld [vmem:[%s1 + $0x10] sm:$0xff]
  %v33 = vld [vmem:[%s1 + $0x18] sm:$0xff]
  %v34 = vld [vmem:[%s1 + $0x20] sm:$0xff]
  %v35 = vld [vmem:[%s1 + $0x28] sm:$0xff]
  %v36 = vld [vmem:[%s1 + $0x30] sm:$0xff]
  %v37 = vld [vmem:[%s1 + $0x38] sm:$0xff]
  %v38 = vld [vmem:[%s1 + $0x40] sm:$0xff]
  %v39 = vld [vmem:[%s1 + $0x48] sm:$0xff]
  %v40 = vld [vmem:[%s1 + $0x50] sm:$0xff]
  %v41 = vld [vmem:[%s1 + $0x58] sm:$0xff]
  %v42 = vld [vmem:[%s1 + $0x60] sm:$0xff]
  %v43 = vld [vmem:[%s1 + $0x68] sm:$0xff]
  %v44 = vld [vmem:[%s1 + $0x70] sm:$0xff]
  %v45 = vld [vmem:[%s1 + $0x78] sm:$0xff]
  %v46 = vld [vmem:[%s1 + $0x80] sm:$0xff]
  %v47 = vld [vmem:[%s1 + $0x88] sm:$0xff]
  %v48 = vld [vmem:[%s1 + $0x90] sm:$0xff]
  %v49 = vld [vmem:[%s1 + $0x98] sm:$0xff]
  %v50 = vld [vmem:[%s1 + $0xa0] sm:$0xff]
  %v51 = vld [vmem:[%s1 + $0xa8] sm:$0xff]
  %v52 = vld [vmem:[%s1 + $0xb0] sm:$0xff]
  %v53 = vld [vmem:[%s1 + $0xb8] sm:$0xff]
  %v54 = vld [vmem:[%s1 + $0xc0] sm:$0xff]
  %v55 = vld [vmem:[%s1 + $0xc8] sm:$0xff]
  %v56 = vld [vmem:[%s1 + $0xd0] sm:$0xff]
  %v57 = vld [vmem:[%s1 + $0xd8] sm:$0xff]
  %v58 = vld [vmem:[%s1 + $0xe0] sm:$0xff]
  %v59 = vld [vmem:[%s1 + $0xe8] sm:$0xff]
  %v60 = vld [vmem:[%s1 + $0xf0] sm:$0xff]
  %v61 = vld [vmem:[%s1 + $0xf8] sm:$0xff]
  %v62 = vld [vmem:[%s1 + $0x100] sm:$0xff]
  %v63 = vld [vmem:[%s1 + $0x108] sm:$0xff]
  %v64 = vld [vmem:[%s1 + $0x110] sm:$0xff]
  %v65 = vld [vmem:[%s1 + $0x118] sm:$0xff]
  %v66 = vld [vmem:[%s1 + $0x120] sm:$0xff]
  %v67 = vld [vmem:[%s1 + $0x128] sm:$0xff]
  %v68 = vld [vmem:[%s1 + $0x130] sm:$0xff]
  %v69 = vld [vmem:[%s1 + $0x138] sm:$0xff]
  %v70 = vld [vmem:[%s1 + $0x140] sm:$0xff]
  %v71 = vld [vmem:[%s1 + $0x148] sm:$0xff]
  %v72 = vld [vmem:[%s1 + $0x150] sm:$0xff]
  %v73 = vld [vmem:[%s1 + $0x158] sm:$0xff]
  %v74 = vld [vmem:[%s1 + $0x160] sm:$0xff]
  %v75 = vld [vmem:[%s1 + $0x168] sm:$0xff]
  %v76 = vld [vmem:[%s1 + $0x170] sm:$0xff]
  %v77 = vld [vmem:[%s1 + $0x178] sm:$0xff]
  %v78 = vld [vmem:[%s1 + $0x180] sm:$0xff]
  %v79 = vld [vmem:[%s1 + $0x188] sm:$0xff]
  %v80 = vld [vmem:[%s2] sm:$0x1]
  %v82 = vperm.slane %v80, 0
  %vm84 = vcmask 130048
  %v86 = vsel %vm84, %v29, 0
  %88 = vmatpush.msra.mxu0 %v45
  %89 = vmatpush.msra.mxu0 %v44
  %90 = vmatpush.msra.mxu0 %v43
  %91 = vmatpush.msra.mxu0 %v42
  %92 = vmatpush.msra.mxu0 %v41
  %93 = vmatpush.msra.mxu0 %v40
  %94 = vmatpush.msra.mxu0 %v39
  %95 = vmatpush.msra.mxu0 %v38
  %96 = vmatpush.msra.mxu0 %v37
  %97 = vmatpush.msra.mxu0 %v36
  %98 = vmatpush.msra.mxu0 %v35
  %99 = vmatpush.msra.mxu0 %v34
  %100 = vmatpush.msra.mxu0 %v33
  %101 = vmatpush.msra.mxu0 %v32
  %102 = vmatpush.msra.mxu0 %v31
  %103 = vmatpush.msra.mxu0 %v30
  %104 = vmatmul.f32.gmra.mxu0 %v26
  %v105 = vpop.f32.mrf.mxu0
  %v106 = vadd.f32 %v82, %v105
  %107 = vdwg.mxu0
  %108 = vmatpush.msra.mxu0 %v61
  %109 = vmatpush.msra.mxu0 %v60
  %110 = vmatpush.msra.mxu0 %v59
  %111 = vmatpush.msra.mxu0 %v58
  %112 = vmatpush.msra.mxu0 %v57
  %113 = vmatpush.msra.mxu0 %v56
  %114 = vmatpush.msra.mxu0 %v55
  %115 = vmatpush.msra.mxu0 %v54
  %116 = vmatpush.msra.mxu0 %v53
  %117 = vmatpush.msra.mxu0 %v52
  %118 = vmatpush.msra.mxu0 %v51
  %119 = vmatpush.msra.mxu0 %v50
  %120 = vmatpush.msra.mxu0 %v49
  %121 = vmatpush.msra.mxu0 %v48
  %122 = vmatpush.msra.mxu0 %v47
  %123 = vmatpush.msra.mxu0 %v46
  %124 = vmatmul.f32.gmra.mxu0 %v27
  %v125 = vpop.f32.mrf.mxu0
  %v126 = vadd.f32 %v106, %v125
  %127 = vdwg.mxu0
  %128 = vmatpush.msra.mxu0 %v77
  %129 = vmatpush.msra.mxu0 %v76
  %130 = vmatpush.msra.mxu0 %v75
  %131 = vmatpush.msra.mxu0 %v74
  %132 = vmatpush.msra.mxu0 %v73
  %133 = vmatpush.msra.mxu0 %v72
  %134 = vmatpush.msra.mxu0 %v71
  %135 = vmatpush.msra.mxu0 %v70
  %136 = vmatpush.msra.mxu0 %v69
  %137 = vmatpush.msra.mxu0 %v68
  %138 = vmatpush.msra.mxu0 %v67
  %139 = vmatpush.msra.mxu0 %v66
  %140 = vmatpush.msra.mxu0 %v65
  %141 = vmatpush.msra.mxu0 %v64
  %142 = vmatpush.msra.mxu0 %v63
  %143 = vmatpush.msra.mxu0 %v62
  %144 = vmatmul.f32.gmra.mxu0 %v28
  %v145 = vpop.f32.mrf.mxu0
  %v146 = vadd.f32 %v126, %v145
  %147 = vdwg.mxu0
  %148 = vmatpush.msra.mxu0 0.0
  %149 = vmatpush.msra.mxu0 0.0
  %150 = vmatpush.msra.mxu0 0.0
  %151 = vmatpush.msra.mxu0 0.0
  %152 = vmatpush.msra.mxu0 0.0
  %153 = vmatpush.msra.mxu0 0.0
  %154 = vmatpush.msra.mxu0 0.0
  %155 = vmatpush.msra.mxu0 0.0
  %156 = vmatpush.msra.mxu0 0.0
  %157 = vmatpush.msra.mxu0 0.0
  %158 = vmatpush.msra.mxu0 0.0
  %159 = vmatpush.msra.mxu0 0.0
  %160 = vmatpush.msra.mxu0 0.0
  %161 = vmatpush.msra.mxu0 0.0
  %162 = vmatpush.msra.mxu0 %v79
  %163 = vmatpush.msra.mxu0 %v78
  %164 = vmatmul.f32.gmra.mxu0 %v86
  %v165 = vpop.f32.mrf.mxu0
  %v166 = vadd.f32 %v146, %v165
  %167 = vdwg.mxu0
  %v168 = vmax.f32 %v166, 0.0
  %v169 = vld [vmem:[%s3] sm:$0xff]
  %v170 = vld [vmem:[%s3 + $0x8] sm:$0xff]
  %v171 = vld [vmem:[%s3 + $0x10] sm:$0xff]
  %v172 = vld [vmem:[%s3 + $0x18] sm:$0xff]
  %v173 = vld [vmem:[%s3 + $0x20] sm:$0xff]
  %v174 = vld [vmem:[%s3 + $0x28] sm:$0xff]
  %v175 = vld [vmem:[%s3 + $0x30] sm:$0xff]
  %v176 = vld [vmem:[%s3 + $0x38] sm:$0xff]
  %v177 = vld [vmem:[%s3 + $0x40] sm:$0xff]
  %v178 = vld [vmem:[%s3 + $0x48] sm:$0xff]
  %v179 = vld [vmem:[%s3 + $0x50] sm:$0xff]
  %v180 = vld [vmem:[%s3 + $0x58] sm:$0xff]
  %v181 = vld [vmem:[%s3 + $0x60] sm:$0xff]
  %v182 = vld [vmem:[%s3 + $0x68] sm:$0xff]
  %v183 = vld [vmem:[%s3 + $0x70] sm:$0xff]
  %v184 = vld [vmem:[%s4] sm:$0x1]
  %v186 = vperm.slane %v184, 0
  %vm188 = vcmask 982016
  %v190 = vsel %vm188, %v168, 0
  %192 = vmatpush.msra.mxu0 0.0
  %193 = vmatpush.msra.mxu0 %v183
  %194 = vmatpush.msra.mxu0 %v182
  %195 = vmatpush.msra.mxu0 %v181
  %196 = vmatpush.msra.mxu0 %v180
  %197 = vmatpush.msra.mxu0 %v179
  %198 = vmatpush.msra.mxu0 %v178
  %199 = vmatpush.msra.mxu0 %v177
  %200 = vmatpush.msra.mxu0 %v176
  %201 = vmatpush.msra.mxu0 %v175
  %202 = vmatpush.msra.mxu0 %v174
  %203 = vmatpush.msra.mxu0 %v173
  %204 = vmatpush.msra.mxu0 %v172
  %205 = vmatpush.msra.mxu0 %v171
  %206 = vmatpush.msra.mxu0 %v170
  %207 = vmatpush.msra.mxu0 %v169
  %208 = vmatmul.f32.gmra.mxu0 %v190
  %v209 = vpop.f32.mrf.mxu0
  %v210 = vadd.f32 %v186, %v209
  %211 = vdwg.mxu0
  %v212 = vmax.f32 %v210, 0.0
  %v213 = vld [vmem:[%s5] sm:$0xff]
  %v214 = vld [vmem:[%s5 + $0x8] sm:$0xff]
  %v215 = vld [vmem:[%s5 + $0x10] sm:$0xff]
  %v216 = vld [vmem:[%s5 + $0x18] sm:$0xff]
  %v217 = vld [vmem:[%s5 + $0x20] sm:$0xff]
  %v218 = vld [vmem:[%s5 + $0x28] sm:$0xff]
  %v219 = vld [vmem:[%s5 + $0x30] sm:$0xff]
  %v220 = vld [vmem:[%s5 + $0x38] sm:$0xff]
  %v221 = vld [vmem:[%s5 + $0x40] sm:$0xff]
  %v222 = vld [vmem:[%s5 + $0x48] sm:$0xff]
  %v223 = vld [vmem:[%s5 + $0x50] sm:$0xf]
  %v224 = vld [vmem:[%s6] sm:$0x1]
  %v226 = vperm.slane %v224, 0
  %vm228 = vcmask 687104
  %v230 = vsel %vm228, %v212, 0
  %vm232 = vcmask 1043456
  %v234 = vsel %vm232, %v223, 0
  %236 = vmatpush.msra.mxu0 0.0
  %237 = vmatpush.msra.mxu0 0.0
  %238 = vmatpush.msra.mxu0 0.0
  %239 = vmatpush.msra.mxu0 0.0
  %240 = vmatpush.msra.mxu0 0.0
  %241 = vmatpush.msra.mxu0 %v234
  %242 = vmatpush.msra.mxu0 %v222
  %243 = vmatpush.msra.mxu0 %v221
  %244 = vmatpush.msra.mxu0 %v220
  %245 = vmatpush.msra.mxu0 %v219
  %246 = vmatpush.msra.mxu0 %v218
  %247 = vmatpush.msra.mxu0 %v217
  %248 = vmatpush.msra.mxu0 %v216
  %249 = vmatpush.msra.mxu0 %v215
  %250 = vmatpush.msra.mxu0 %v214
  %251 = vmatpush.msra.mxu0 %v213
  %252 = vmatmul.f32.gmra.mxu0 %v230
  %v253 = vpop.f32.mrf.mxu0
  %v254 = vadd.f32 %v226, %v253
  %255 = vdwg.mxu0
  %vm256 = vcmask 80896
  %257 = vst.msk [vmem:[%s7] sm:$0xff] %vm256, %v254
  // Predicated region
  $region30: #{net_forward.5} parent=0 // pred_check
    _
  $region31: #{net_forward.5} parent=0 // pred_check_branch
    %259 = sbr.rel (0) target = $region33
  $region32: #{net_forward.5} parent=0 // pred_region
    _
  $region33: #{net_forward.5} parent=0 // pred_fallthru
    _
  // Predicated region
  $region34: #{net_forward.5} parent=0 // pred_check
    _
  $region35: #{net_forward.5} parent=0 // pred_check_branch
    %261 = sbr.rel (0) target = $region37
  $region36: #{net_forward.5} parent=0 // pred_region
    _
  $region37: #{net_forward.5} parent=0 // pred_fallthru
    _

</llo_original>
